<compile_context>
chip_gen: v5e
topology: v5e:2x2
jax: 0.10.0
libtpu: 0.0.40
codegen_flags: <defaults>
</compile_context>

<pallas_src>
import jax
import jax.numpy as jnp
from jax import lax
from jax.experimental import pallas as pl
from jax.experimental.pallas import tpu as pltpu

INPUT_SIZE = 28
HIDDEN = 64
NUM_CLASSES = 10

HP = 128             # each gate padded to one full 128-lane vreg (N side only)
NGATES = 4
GP = NGATES * HP     # padded gate width; blocks ordered (i, f, o, g)
B_PAD = 8            # pad batch to the 8-sublane vreg dimension
OUT_PAD = 128        # lane-dense output slab; sliced to NUM_CLASSES in wrapper

# Kernel gate-block order: sigmoid gates (i, f, o) first, tanh gate (g) last.
# Mapping new block k -> PyTorch gate index (PyTorch order is i, f, g, o).
_GATE_PERM = (0, 1, 3, 2)


def _sigmoid(x):
    # sigmoid(x) == 0.5 * tanh(0.5 * x) + 0.5: one EUP op per element instead
    # of exp + add + reciprocal; mathematically exact.
    return 0.5 * jnp.tanh(0.5 * x) + 0.5


def lstm_classifier_kernel(x_ref, wih_ref, whh_ref, b_ref, wout_ref, bout_ref,
                           out_ref, xw_scr):
    # x_ref:    (T*B_PAD, I)        bf16, row t*B_PAD + b == x[b, t, :]
    # wih_ref:  (I, GP)             bf16 (gate-padded W_ih^T, blocks i,f,o,g)
    # whh_ref:  (HIDDEN, GP)        bf16 (UNPADDED contraction dim; padded N)
    # b_ref:    (1, GP)             f32  (b_ih + b_hh, gate-padded)
    # wout_ref: (HIDDEN, OUT_PAD)   bf16 (padded W_out^T)
    # bout_ref: (1, OUT_PAD)        f32
    # out_ref:  (B_PAD, OUT_PAD)    f32
    # xw_scr:   (T*B_PAD, GP)       f32 scratch: hoisted input projection
    TB = x_ref.shape[0]
    Bp = B_PAD
    T = TB // Bp

    # ---- Hoisted input projection: one bf16 MXU matmul for all timesteps ----
    xw_scr[...] = (
        jnp.dot(x_ref[...], wih_ref[...], preferred_element_type=jnp.float32)
        + b_ref[...])

    h0 = jnp.zeros((Bp, HIDDEN), jnp.float32)
    c0 = jnp.zeros((Bp, HP), jnp.float32)

    def step(t, carry):
        h, c = carry                          # h: (Bp, HIDDEN), c: (Bp, HP)
        row = pl.multiple_of(t * Bp, Bp)      # sublane-aligned dynamic slice
        # W_hh re-read from VMEM each step (vld slots are plentiful); K=64,
        # no zero-padded contraction rows.
        # TODO(synk): hold W_hh in MXU staging registers across the 8 steps
        # (pltpu.matmul_push_rhs / matmul_acc_lhs / matmul_pop) instead of
        # re-pushing it via jnp.dot every step.
        pre = xw_scr[pl.ds(row, Bp), :] + jnp.dot(
            h.astype(jnp.bfloat16), whh_ref[...],
            preferred_element_type=jnp.float32)
        # Gate layout (i, f, o, g): one fused sigmoid over the contiguous
        # 3*HP sigmoid slab, one tanh over the last HP block.
        sig = _sigmoid(pre[:, :3 * HP])
        i_g = sig[:, 0 * HP:1 * HP]
        f_g = sig[:, 1 * HP:2 * HP]
        o_g = sig[:, 2 * HP:3 * HP]
        g_g = jnp.tanh(pre[:, 3 * HP:])
        c_new = f_g * c + i_g * g_g
        h_new = o_g * jnp.tanh(c_new)
        # Only the real HIDDEN lanes ever feed back through W_hh.
        return h_new[:, :HIDDEN], c_new

    h, _ = lax.fori_loop(0, T, step, (h0, c0), unroll=True)

    # Final linear layer on the last timestep's hidden state (lane-dense slab).
    out_ref[...] = (jnp.dot(h.astype(jnp.bfloat16), wout_ref[...],
                            preferred_element_type=jnp.float32)
                    + bout_ref[...]).astype(out_ref.dtype)


@jax.jit
def rnn_forward(x, w_ih, w_hh, b_ih, b_hh, w_out, b_out):
    """x: (B, T, INPUT_SIZE) float32, batch_first like PyTorch."""
    B, T, I = x.shape
    H = w_hh.shape[1]                 # w_hh is (4H, H)
    assert I == INPUT_SIZE and H == HIDDEN and H <= HP and B <= B_PAD

    f32, bf16 = jnp.float32, jnp.bfloat16
    perm = list(_GATE_PERM)

    # Gate-padded, transposed weights; blocks reordered to (i, f, o, g).
    # Padded gate lanes have zero weights/bias.
    wih_4 = w_ih.T.reshape(I, NGATES, H)[:, perm, :]
    wih_p = (jnp.zeros((I, NGATES, HP), f32).at[:, :, :H].set(wih_4)
             .reshape(I, GP).astype(bf16))
    whh_4 = w_hh.T.reshape(H, NGATES, H)[:, perm, :]
    whh_p = (jnp.zeros((H, NGATES, HP), f32).at[:, :, :H].set(whh_4)
             .reshape(H, GP).astype(bf16))            # contraction dim = H = 64
    b_4 = (b_ih + b_hh).reshape(NGATES, H)[perm, :]
    b_p = jnp.zeros((NGATES, HP), f32).at[:, :H].set(b_4).reshape(1, GP)
    wout_p = (jnp.zeros((H, OUT_PAD), f32).at[:, :NUM_CLASSES].set(w_out.T)
              .astype(bf16))
    bout_p = jnp.zeros((1, OUT_PAD), f32).at[0, :NUM_CLASSES].set(b_out)

    # Batch-pad to 8 sublanes, time-major, flattened so row t*B_PAD + b = x[b,t].
    x_tbi = jnp.transpose(x, (1, 0, 2))                        # (T, B, I)
    x_pad = jnp.zeros((T, B_PAD, I), f32).at[:, :B, :].set(x_tbi)
    x2d = x_pad.reshape(T * B_PAD, I).astype(bf16)             # (T*B_PAD, I)

    # TODO(synk): for large batches, add a batch grid axis with
    # dimension_semantics=("parallel",) so v7x's two TensorCores are both used.
    out = pl.pallas_call(
        lstm_classifier_kernel,
        out_shape=jax.ShapeDtypeStruct((B_PAD, OUT_PAD), jnp.float32),
        in_specs=[pl.BlockSpec(memory_space=pltpu.MemorySpace.VMEM)
                  for _ in range(6)],
        out_specs=pl.BlockSpec(memory_space=pltpu.MemorySpace.VMEM),
        scratch_shapes=[pltpu.VMEM((T * B_PAD, GP), jnp.float32)],
    )(x2d, wih_p, whh_p, b_p, wout_p, bout_p)

    return out[:B, :NUM_CLASSES]


def reference_forward(x, w_ih, w_hh, b_ih, b_hh, w_out, b_out,
                      emulate_bf16=False):
    """Pure-JAX reference (PyTorch LSTM semantics, gate order i,f,g,o)."""
    B, T, I = x.shape
    H = w_hh.shape[1]

    def cast(a):
        return a.astype(jnp.bfloat16) if emulate_bf16 else a

    wih_t, whh_t, wout_t = cast(w_ih.T), cast(w_hh.T), cast(w_out.T)
    b = b_ih + b_hh
    h = jnp.zeros((B, H), jnp.float32)
    c = jnp.zeros((B, H), jnp.float32)
    for t in range(T):
        g = (jnp.dot(cast(x[:, t, :]), wih_t, preferred_element_type=jnp.float32)
             + jnp.dot(cast(h), whh_t, preferred_element_type=jnp.float32) + b)
        i = jax.nn.sigmoid(g[:, 0 * H:1 * H])
        f = jax.nn.sigmoid(g[:, 1 * H:2 * H])
        gg = jnp.tanh(g[:, 2 * H:3 * H])
        o = jax.nn.sigmoid(g[:, 3 * H:4 * H])
        c = f * c + i * gg
        h = o * jnp.tanh(c)
    return jnp.dot(cast(h), wout_t, preferred_element_type=jnp.float32) + b_out


if __name__ == "__main__":
    key = jax.random.PRNGKey(0)
    ks = jax.random.split(key, 8)
    B, T, I, H = 2, 8, INPUT_SIZE, HIDDEN

    # Deterministic synthetic parameters (PyTorch LSTM gate order: i, f, g, o).
    scale = 1.0 / jnp.sqrt(H)
    w_ih = jax.random.uniform(ks[0], (4 * H, I), jnp.float32, -scale, scale)
    w_hh = jax.random.uniform(ks[1], (4 * H, H), jnp.float32, -scale, scale)
    b_ih = jax.random.uniform(ks[2], (4 * H,), jnp.float32, -scale, scale)
    b_hh = jax.random.uniform(ks[3], (4 * H,), jnp.float32, -scale, scale)
    w_out = jax.random.uniform(ks[4], (NUM_CLASSES, H), jnp.float32, -scale, scale)
    b_out = jax.random.uniform(ks[5], (NUM_CLASSES,), jnp.float32, -scale, scale)

    x = jax.random.normal(ks[6], (B, T, I), jnp.float32)

    out = jax.block_until_ready(
        rnn_forward(x, w_ih, w_hh, b_ih, b_hh, w_out, b_out))
    assert out.shape == (B, NUM_CLASSES)

    # Tight check vs a reference that emulates the bf16 matmul operands.
    ref_bf16 = reference_forward(x, w_ih, w_hh, b_ih, b_hh, w_out, b_out,
                                 emulate_bf16=True)
    assert jnp.allclose(out, ref_bf16, atol=1e-3, rtol=1e-3)

    # Looser check vs the pure-f32 PyTorch-semantics reference (bf16 rounding).
    ref_f32 = reference_forward(x, w_ih, w_hh, b_ih, b_hh, w_out, b_out,
                                emulate_bf16=False)
    assert jnp.allclose(out, ref_f32, atol=5e-2, rtol=5e-2)

    print("KERNEL_OK")
</pallas_src>

<mosaic_0001>
module attributes {stable_mosaic.version = 11 : i64} {
  func.func @lstm_classifier_kernel(%arg0: memref<64x28xbf16, #tpu.memory_space<vmem>>, %arg1: memref<28x512xbf16, #tpu.memory_space<vmem>>, %arg2: memref<64x512xbf16, #tpu.memory_space<vmem>>, %arg3: memref<1x512xf32, #tpu.memory_space<vmem>>, %arg4: memref<64x128xbf16, #tpu.memory_space<vmem>>, %arg5: memref<1x128xf32, #tpu.memory_space<vmem>>, %arg6: memref<8x128xf32, #tpu.memory_space<vmem>>, %arg7: memref<64x512xf32, #tpu.memory_space<vmem>>) attributes {dimension_semantics = [], scalar_prefetch = 0 : i64, scratch_operands = 1 : i64, tpu.core_type = #tpu.core_type<tc>} {
    %c0 = arith.constant 0 : index
    %c0_0 = arith.constant 0 : index
    %0 = vector.load %arg0[%c0, %c0_0] : memref<64x28xbf16, #tpu.memory_space<vmem>>, vector<64x28xbf16>
    %c0_1 = arith.constant 0 : index
    %c0_2 = arith.constant 0 : index
    %1 = vector.load %arg1[%c0_1, %c0_2] : memref<28x512xbf16, #tpu.memory_space<vmem>>, vector<28x512xbf16>
    %cst = arith.constant dense<0.000000e+00> : vector<64x512xf32>
    %2 = tpu.matmul %0, %1, %cst {dimension_numbers = #tpu.dot_dimension_numbers<[1], [0], [0], [1], [0, 0, 1, 1], [], []>} : vector<64x28xbf16>, vector<28x512xbf16>, vector<64x512xf32> -> vector<64x512xf32>
    %c0_3 = arith.constant 0 : index
    %c0_4 = arith.constant 0 : index
    %3 = vector.load %arg3[%c0_3, %c0_4] : memref<1x512xf32, #tpu.memory_space<vmem>>, vector<1x512xf32>
    %4 = vector.broadcast %3 : vector<1x512xf32> to vector<64x512xf32>
    %5 = arith.addf %2, %4 : vector<64x512xf32>
    %c0_5 = arith.constant 0 : index
    %c0_6 = arith.constant 0 : index
    %6 = vector.load %arg7[%c0_5, %c0_6] : memref<64x512xf32, #tpu.memory_space<vmem>>, vector<64x512xf32>
    tpu.vector_store %arg7[%c0_5, %c0_6], %5 {strides = array<i32>} : memref<64x512xf32, #tpu.memory_space<vmem>>, vector<64x512xf32>,
    %cst_7 = arith.constant 0.000000e+00 : f32
    %7 = vector.broadcast %cst_7 : f32 to vector<8x64xf32>
    %cst_8 = arith.constant 0.000000e+00 : f32
    %8 = vector.broadcast %cst_8 : f32 to vector<8x128xf32>
    %c0_i32 = arith.constant 0 : i32
    %c8_i32 = arith.constant 8 : i32
    %9 = arith.muli %c0_i32, %c8_i32 : i32
    %10 = tpu.assume_multiple %9, 8 : i32
    %11 = arith.index_cast %10 : i32 to index
    %c0_9 = arith.constant 0 : index
    %12 = vector.load %arg7[%11, %c0_9] : memref<64x512xf32, #tpu.memory_space<vmem>>, vector<8x512xf32>
    %13 = arith.truncf %7 : vector<8x64xf32> to vector<8x64xbf16>
    %c0_10 = arith.constant 0 : index
    %c0_11 = arith.constant 0 : index
    %14 = vector.load %arg2[%c0_10, %c0_11] : memref<64x512xbf16, #tpu.memory_space<vmem>>, vector<64x512xbf16>
    %cst_12 = arith.constant dense<0.000000e+00> : vector<8x512xf32>
    %15 = tpu.matmul %13, %14, %cst_12 {dimension_numbers = #tpu.dot_dimension_numbers<[1], [0], [0], [1], [0, 0, 1, 1], [], []>} : vector<8x64xbf16>, vector<64x512xbf16>, vector<8x512xf32> -> vector<8x512xf32>
    %16 = arith.addf %12, %15 : vector<8x512xf32>
    %17 = vector.extract_strided_slice %16 {offsets = [0, 0], sizes = [8, 384], strides = [1, 1]} : vector<8x512xf32> to vector<8x384xf32>
    %cst_13 = arith.constant 5.000000e-01 : f32
    %18 = vector.broadcast %cst_13 : f32 to vector<8x384xf32>
    %19 = arith.mulf %18, %17 : vector<8x384xf32>
    %20 = math.tanh %19 : vector<8x384xf32>
    %cst_14 = arith.constant 5.000000e-01 : f32
    %21 = vector.broadcast %cst_14 : f32 to vector<8x384xf32>
    %22 = arith.mulf %21, %20 : vector<8x384xf32>
    %cst_15 = arith.constant 5.000000e-01 : f32
    %23 = vector.broadcast %cst_15 : f32 to vector<8x384xf32>
    %24 = arith.addf %22, %23 : vector<8x384xf32>
    %25 = vector.extract_strided_slice %24 {offsets = [0, 0], sizes = [8, 128], strides = [1, 1]} : vector<8x384xf32> to vector<8x128xf32>
    %26 = vector.extract_strided_slice %24 {offsets = [0, 128], sizes = [8, 128], strides = [1, 1]} : vector<8x384xf32> to vector<8x128xf32>
    %27 = vector.extract_strided_slice %24 {offsets = [0, 256], sizes = [8, 128], strides = [1, 1]} : vector<8x384xf32> to vector<8x128xf32>
    %28 = vector.extract_strided_slice %16 {offsets = [0, 384], sizes = [8, 128], strides = [1, 1]} : vector<8x512xf32> to vector<8x128xf32>
    %29 = math.tanh %28 : vector<8x128xf32>
    %30 = arith.mulf %26, %8 : vector<8x128xf32>
    %31 = arith.mulf %25, %29 : vector<8x128xf32>
    %32 = arith.addf %30, %31 : vector<8x128xf32>
    %33 = math.tanh %32 : vector<8x128xf32>
    %34 = arith.mulf %27, %33 : vector<8x128xf32>
    %35 = vector.extract_strided_slice %34 {offsets = [0, 0], sizes = [8, 64], strides = [1, 1]} : vector<8x128xf32> to vector<8x64xf32>
    %c1_i32 = arith.constant 1 : i32
    %c8_i32_16 = arith.constant 8 : i32
    %36 = arith.muli %c1_i32, %c8_i32_16 : i32
    %37 = tpu.assume_multiple %36, 8 : i32
    %38 = arith.index_cast %37 : i32 to index
    %c0_17 = arith.constant 0 : index
    %39 = vector.load %arg7[%38, %c0_17] : memref<64x512xf32, #tpu.memory_space<vmem>>, vector<8x512xf32>
    %40 = arith.truncf %35 : vector<8x64xf32> to vector<8x64xbf16>
    %c0_18 = arith.constant 0 : index
    %c0_19 = arith.constant 0 : index
    %41 = vector.load %arg2[%c0_18, %c0_19] : memref<64x512xbf16, #tpu.memory_space<vmem>>, vector<64x512xbf16>
    %cst_20 = arith.constant dense<0.000000e+00> : vector<8x512xf32>
    %42 = tpu.matmul %40, %41, %cst_20 {dimension_numbers = #tpu.dot_dimension_numbers<[1], [0], [0], [1], [0, 0, 1, 1], [], []>} : vector<8x64xbf16>, vector<64x512xbf16>, vector<8x512xf32> -> vector<8x512xf32>
    %43 = arith.addf %39, %42 : vector<8x512xf32>
    %44 = vector.extract_strided_slice %43 {offsets = [0, 0], sizes = [8, 384], strides = [1, 1]} : vector<8x512xf32> to vector<8x384xf32>
    %cst_21 = arith.constant 5.000000e-01 : f32
    %45 = vector.broadcast %cst_21 : f32 to vector<8x384xf32>
    %46 = arith.mulf %45, %44 : vector<8x384xf32>
    %47 = math.tanh %46 : vector<8x384xf32>
    %cst_22 = arith.constant 5.000000e-01 : f32
    %48 = vector.broadcast %cst_22 : f32 to vector<8x384xf32>
    %49 = arith.mulf %48, %47 : vector<8x384xf32>
    %cst_23 = arith.constant 5.000000e-01 : f32
    %50 = vector.broadcast %cst_23 : f32 to vector<8x384xf32>
    %51 = arith.addf %49, %50 : vector<8x384xf32>
    %52 = vector.extract_strided_slice %51 {offsets = [0, 0], sizes = [8, 128], strides = [1, 1]} : vector<8x384xf32> to vector<8x128xf32>
    %53 = vector.extract_strided_slice %51 {offsets = [0, 128], sizes = [8, 128], strides = [1, 1]} : vector<8x384xf32> to vector<8x128xf32>
    %54 = vector.extract_strided_slice %51 {offsets = [0, 256], sizes = [8, 128], strides = [1, 1]} : vector<8x384xf32> to vector<8x128xf32>
    %55 = vector.extract_strided_slice %43 {offsets = [0, 384], sizes = [8, 128], strides = [1, 1]} : vector<8x512xf32> to vector<8x128xf32>
    %56 = math.tanh %55 : vector<8x128xf32>
    %57 = arith.mulf %53, %32 : vector<8x128xf32>
    %58 = arith.mulf %52, %56 : vector<8x128xf32>
    %59 = arith.addf %57, %58 : vector<8x128xf32>
    %60 = math.tanh %59 : vector<8x128xf32>
    %61 = arith.mulf %54, %60 : vector<8x128xf32>
    %62 = vector.extract_strided_slice %61 {offsets = [0, 0], sizes = [8, 64], strides = [1, 1]} : vector<8x128xf32> to vector<8x64xf32>
    %c2_i32 = arith.constant 2 : i32
    %c8_i32_24 = arith.constant 8 : i32
    %63 = arith.muli %c2_i32, %c8_i32_24 : i32
    %64 = tpu.assume_multiple %63, 8 : i32
    %65 = arith.index_cast %64 : i32 to index
    %c0_25 = arith.constant 0 : index
    %66 = vector.load %arg7[%65, %c0_25] : memref<64x512xf32, #tpu.memory_space<vmem>>, vector<8x512xf32>
    %67 = arith.truncf %62 : vector<8x64xf32> to vector<8x64xbf16>
    %c0_26 = arith.constant 0 : index
    %c0_27 = arith.constant 0 : index
    %68 = vector.load %arg2[%c0_26, %c0_27] : memref<64x512xbf16, #tpu.memory_space<vmem>>, vector<64x512xbf16>
    %cst_28 = arith.constant dense<0.000000e+00> : vector<8x512xf32>
    %69 = tpu.matmul %67, %68, %cst_28 {dimension_numbers = #tpu.dot_dimension_numbers<[1], [0], [0], [1], [0, 0, 1, 1], [], []>} : vector<8x64xbf16>, vector<64x512xbf16>, vector<8x512xf32> -> vector<8x512xf32>
    %70 = arith.addf %66, %69 : vector<8x512xf32>
    %71 = vector.extract_strided_slice %70 {offsets = [0, 0], sizes = [8, 384], strides = [1, 1]} : vector<8x512xf32> to vector<8x384xf32>
    %cst_29 = arith.constant 5.000000e-01 : f32
    %72 = vector.broadcast %cst_29 : f32 to vector<8x384xf32>
    %73 = arith.mulf %72, %71 : vector<8x384xf32>
    %74 = math.tanh %73 : vector<8x384xf32>
    %cst_30 = arith.constant 5.000000e-01 : f32
    %75 = vector.broadcast %cst_30 : f32 to vector<8x384xf32>
    %76 = arith.mulf %75, %74 : vector<8x384xf32>
    %cst_31 = arith.constant 5.000000e-01 : f32
    %77 = vector.broadcast %cst_31 : f32 to vector<8x384xf32>
    %78 = arith.addf %76, %77 : vector<8x384xf32>
    %79 = vector.extract_strided_slice %78 {offsets = [0, 0], sizes = [8, 128], strides = [1, 1]} : vector<8x384xf32> to vector<8x128xf32>
    %80 = vector.extract_strided_slice %78 {offsets = [0, 128], sizes = [8, 128], strides = [1, 1]} : vector<8x384xf32> to vector<8x128xf32>
    %81 = vector.extract_strided_slice %78 {offsets = [0, 256], sizes = [8, 128], strides = [1, 1]} : vector<8x384xf32> to vector<8x128xf32>
    %82 = vector.extract_strided_slice %70 {offsets = [0, 384], sizes = [8, 128], strides = [1, 1]} : vector<8x512xf32> to vector<8x128xf32>
    %83 = math.tanh %82 : vector<8x128xf32>
    %84 = arith.mulf %80, %59 : vector<8x128xf32>
    %85 = arith.mulf %79, %83 : vector<8x128xf32>
    %86 = arith.addf %84, %85 : vector<8x128xf32>
    %87 = math.tanh %86 : vector<8x128xf32>
    %88 = arith.mulf %81, %87 : vector<8x128xf32>
    %89 = vector.extract_strided_slice %88 {offsets = [0, 0], sizes = [8, 64], strides = [1, 1]} : vector<8x128xf32> to vector<8x64xf32>
    %c3_i32 = arith.constant 3 : i32
    %c8_i32_32 = arith.constant 8 : i32
    %90 = arith.muli %c3_i32, %c8_i32_32 : i32
    %91 = tpu.assume_multiple %90, 8 : i32
    %92 = arith.index_cast %91 : i32 to index
    %c0_33 = arith.constant 0 : index
    %93 = vector.load %arg7[%92, %c0_33] : memref<64x512xf32, #tpu.memory_space<vmem>>, vector<8x512xf32>
    %94 = arith.truncf %89 : vector<8x64xf32> to vector<8x64xbf16>
    %c0_34 = arith.constant 0 : index
    %c0_35 = arith.constant 0 : index
    %95 = vector.load %arg2[%c0_34, %c0_35] : memref<64x512xbf16, #tpu.memory_space<vmem>>, vector<64x512xbf16>
    %cst_36 = arith.constant dense<0.000000e+00> : vector<8x512xf32>
    %96 = tpu.matmul %94, %95, %cst_36 {dimension_numbers = #tpu.dot_dimension_numbers<[1], [0], [0], [1], [0, 0, 1, 1], [], []>} : vector<8x64xbf16>, vector<64x512xbf16>, vector<8x512xf32> -> vector<8x512xf32>
    %97 = arith.addf %93, %96 : vector<8x512xf32>
    %98 = vector.extract_strided_slice %97 {offsets = [0, 0], sizes = [8, 384], strides = [1, 1]} : vector<8x512xf32> to vector<8x384xf32>
    %cst_37 = arith.constant 5.000000e-01 : f32
    %99 = vector.broadcast %cst_37 : f32 to vector<8x384xf32>
    %100 = arith.mulf %99, %98 : vector<8x384xf32>
    %101 = math.tanh %100 : vector<8x384xf32>
    %cst_38 = arith.constant 5.000000e-01 : f32
    %102 = vector.broadcast %cst_38 : f32 to vector<8x384xf32>
    %103 = arith.mulf %102, %101 : vector<8x384xf32>
    %cst_39 = arith.constant 5.000000e-01 : f32
    %104 = vector.broadcast %cst_39 : f32 to vector<8x384xf32>
    %105 = arith.addf %103, %104 : vector<8x384xf32>
    %106 = vector.extract_strided_slice %105 {offsets = [0, 0], sizes = [8, 128], strides = [1, 1]} : vector<8x384xf32> to vector<8x128xf32>
    %107 = vector.extract_strided_slice %105 {offsets = [0, 128], sizes = [8, 128], strides = [1, 1]} : vector<8x384xf32> to vector<8x128xf32>
    %108 = vector.extract_strided_slice %105 {offsets = [0, 256], sizes = [8, 128], strides = [1, 1]} : vector<8x384xf32> to vector<8x128xf32>
    %109 = vector.extract_strided_slice %97 {offsets = [0, 384], sizes = [8, 128], strides = [1, 1]} : vector<8x512xf32> to vector<8x128xf32>
    %110 = math.tanh %109 : vector<8x128xf32>
    %111 = arith.mulf %107, %86 : vector<8x128xf32>
    %112 = arith.mulf %106, %110 : vector<8x128xf32>
    %113 = arith.addf %111, %112 : vector<8x128xf32>
    %114 = math.tanh %113 : vector<8x128xf32>
    %115 = arith.mulf %108, %114 : vector<8x128xf32>
    %116 = vector.extract_strided_slice %115 {offsets = [0, 0], sizes = [8, 64], strides = [1, 1]} : vector<8x128xf32> to vector<8x64xf32>
    %c4_i32 = arith.constant 4 : i32
    %c8_i32_40 = arith.constant 8 : i32
    %117 = arith.muli %c4_i32, %c8_i32_40 : i32
    %118 = tpu.assume_multiple %117, 8 : i32
    %119 = arith.index_cast %118 : i32 to index
    %c0_41 = arith.constant 0 : index
    %120 = vector.load %arg7[%119, %c0_41] : memref<64x512xf32, #tpu.memory_space<vmem>>, vector<8x512xf32>
    %121 = arith.truncf %116 : vector<8x64xf32> to vector<8x64xbf16>
    %c0_42 = arith.constant 0 : index
    %c0_43 = arith.constant 0 : index
    %122 = vector.load %arg2[%c0_42, %c0_43] : memref<64x512xbf16, #tpu.memory_space<vmem>>, vector<64x512xbf16>
    %cst_44 = arith.constant dense<0.000000e+00> : vector<8x512xf32>
    %123 = tpu.matmul %121, %122, %cst_44 {dimension_numbers = #tpu.dot_dimension_numbers<[1], [0], [0], [1], [0, 0, 1, 1], [], []>} : vector<8x64xbf16>, vector<64x512xbf16>, vector<8x512xf32> -> vector<8x512xf32>
    %124 = arith.addf %120, %123 : vector<8x512xf32>
    %125 = vector.extract_strided_slice %124 {offsets = [0, 0], sizes = [8, 384], strides = [1, 1]} : vector<8x512xf32> to vector<8x384xf32>
    %cst_45 = arith.constant 5.000000e-01 : f32
    %126 = vector.broadcast %cst_45 : f32 to vector<8x384xf32>
    %127 = arith.mulf %126, %125 : vector<8x384xf32>
    %128 = math.tanh %127 : vector<8x384xf32>
    %cst_46 = arith.constant 5.000000e-01 : f32
    %129 = vector.broadcast %cst_46 : f32 to vector<8x384xf32>
    %130 = arith.mulf %129, %128 : vector<8x384xf32>
    %cst_47 = arith.constant 5.000000e-01 : f32
    %131 = vector.broadcast %cst_47 : f32 to vector<8x384xf32>
    %132 = arith.addf %130, %131 : vector<8x384xf32>
    %133 = vector.extract_strided_slice %132 {offsets = [0, 0], sizes = [8, 128], strides = [1, 1]} : vector<8x384xf32> to vector<8x128xf32>
    %134 = vector.extract_strided_slice %132 {offsets = [0, 128], sizes = [8, 128], strides = [1, 1]} : vector<8x384xf32> to vector<8x128xf32>
    %135 = vector.extract_strided_slice %132 {offsets = [0, 256], sizes = [8, 128], strides = [1, 1]} : vector<8x384xf32> to vector<8x128xf32>
    %136 = vector.extract_strided_slice %124 {offsets = [0, 384], sizes = [8, 128], strides = [1, 1]} : vector<8x512xf32> to vector<8x128xf32>
    %137 = math.tanh %136 : vector<8x128xf32>
    %138 = arith.mulf %134, %113 : vector<8x128xf32>
    %139 = arith.mulf %133, %137 : vector<8x128xf32>
    %140 = arith.addf %138, %139 : vector<8x128xf32>
    %141 = math.tanh %140 : vector<8x128xf32>
    %142 = arith.mulf %135, %141 : vector<8x128xf32>
    %143 = vector.extract_strided_slice %142 {offsets = [0, 0], sizes = [8, 64], strides = [1, 1]} : vector<8x128xf32> to vector<8x64xf32>
    %c5_i32 = arith.constant 5 : i32
    %c8_i32_48 = arith.constant 8 : i32
    %144 = arith.muli %c5_i32, %c8_i32_48 : i32
    %145 = tpu.assume_multiple %144, 8 : i32
    %146 = arith.index_cast %145 : i32 to index
    %c0_49 = arith.constant 0 : index
    %147 = vector.load %arg7[%146, %c0_49] : memref<64x512xf32, #tpu.memory_space<vmem>>, vector<8x512xf32>
    %148 = arith.truncf %143 : vector<8x64xf32> to vector<8x64xbf16>
    %c0_50 = arith.constant 0 : index
    %c0_51 = arith.constant 0 : index
    %149 = vector.load %arg2[%c0_50, %c0_51] : memref<64x512xbf16, #tpu.memory_space<vmem>>, vector<64x512xbf16>
    %cst_52 = arith.constant dense<0.000000e+00> : vector<8x512xf32>
    %150 = tpu.matmul %148, %149, %cst_52 {dimension_numbers = #tpu.dot_dimension_numbers<[1], [0], [0], [1], [0, 0, 1, 1], [], []>} : vector<8x64xbf16>, vector<64x512xbf16>, vector<8x512xf32> -> vector<8x512xf32>
    %151 = arith.addf %147, %150 : vector<8x512xf32>
    %152 = vector.extract_strided_slice %151 {offsets = [0, 0], sizes = [8, 384], strides = [1, 1]} : vector<8x512xf32> to vector<8x384xf32>
    %cst_53 = arith.constant 5.000000e-01 : f32
    %153 = vector.broadcast %cst_53 : f32 to vector<8x384xf32>
    %154 = arith.mulf %153, %152 : vector<8x384xf32>
    %155 = math.tanh %154 : vector<8x384xf32>
    %cst_54 = arith.constant 5.000000e-01 : f32
    %156 = vector.broadcast %cst_54 : f32 to vector<8x384xf32>
    %157 = arith.mulf %156, %155 : vector<8x384xf32>
    %cst_55 = arith.constant 5.000000e-01 : f32
    %158 = vector.broadcast %cst_55 : f32 to vector<8x384xf32>
    %159 = arith.addf %157, %158 : vector<8x384xf32>
    %160 = vector.extract_strided_slice %159 {offsets = [0, 0], sizes = [8, 128], strides = [1, 1]} : vector<8x384xf32> to vector<8x128xf32>
    %161 = vector.extract_strided_slice %159 {offsets = [0, 128], sizes = [8, 128], strides = [1, 1]} : vector<8x384xf32> to vector<8x128xf32>
    %162 = vector.extract_strided_slice %159 {offsets = [0, 256], sizes = [8, 128], strides = [1, 1]} : vector<8x384xf32> to vector<8x128xf32>
    %163 = vector.extract_strided_slice %151 {offsets = [0, 384], sizes = [8, 128], strides = [1, 1]} : vector<8x512xf32> to vector<8x128xf32>
    %164 = math.tanh %163 : vector<8x128xf32>
    %165 = arith.mulf %161, %140 : vector<8x128xf32>
    %166 = arith.mulf %160, %164 : vector<8x128xf32>
    %167 = arith.addf %165, %166 : vector<8x128xf32>
    %168 = math.tanh %167 : vector<8x128xf32>
    %169 = arith.mulf %162, %168 : vector<8x128xf32>
    %170 = vector.extract_strided_slice %169 {offsets = [0, 0], sizes = [8, 64], strides = [1, 1]} : vector<8x128xf32> to vector<8x64xf32>
    %c6_i32 = arith.constant 6 : i32
    %c8_i32_56 = arith.constant 8 : i32
    %171 = arith.muli %c6_i32, %c8_i32_56 : i32
    %172 = tpu.assume_multiple %171, 8 : i32
    %173 = arith.index_cast %172 : i32 to index
    %c0_57 = arith.constant 0 : index
    %174 = vector.load %arg7[%173, %c0_57] : memref<64x512xf32, #tpu.memory_space<vmem>>, vector<8x512xf32>
    %175 = arith.truncf %170 : vector<8x64xf32> to vector<8x64xbf16>
    %c0_58 = arith.constant 0 : index
    %c0_59 = arith.constant 0 : index
    %176 = vector.load %arg2[%c0_58, %c0_59] : memref<64x512xbf16, #tpu.memory_space<vmem>>, vector<64x512xbf16>
    %cst_60 = arith.constant dense<0.000000e+00> : vector<8x512xf32>
    %177 = tpu.matmul %175, %176, %cst_60 {dimension_numbers = #tpu.dot_dimension_numbers<[1], [0], [0], [1], [0, 0, 1, 1], [], []>} : vector<8x64xbf16>, vector<64x512xbf16>, vector<8x512xf32> -> vector<8x512xf32>
    %178 = arith.addf %174, %177 : vector<8x512xf32>
    %179 = vector.extract_strided_slice %178 {offsets = [0, 0], sizes = [8, 384], strides = [1, 1]} : vector<8x512xf32> to vector<8x384xf32>
    %cst_61 = arith.constant 5.000000e-01 : f32
    %180 = vector.broadcast %cst_61 : f32 to vector<8x384xf32>
    %181 = arith.mulf %180, %179 : vector<8x384xf32>
    %182 = math.tanh %181 : vector<8x384xf32>
    %cst_62 = arith.constant 5.000000e-01 : f32
    %183 = vector.broadcast %cst_62 : f32 to vector<8x384xf32>
    %184 = arith.mulf %183, %182 : vector<8x384xf32>
    %cst_63 = arith.constant 5.000000e-01 : f32
    %185 = vector.broadcast %cst_63 : f32 to vector<8x384xf32>
    %186 = arith.addf %184, %185 : vector<8x384xf32>
    %187 = vector.extract_strided_slice %186 {offsets = [0, 0], sizes = [8, 128], strides = [1, 1]} : vector<8x384xf32> to vector<8x128xf32>
    %188 = vector.extract_strided_slice %186 {offsets = [0, 128], sizes = [8, 128], strides = [1, 1]} : vector<8x384xf32> to vector<8x128xf32>
    %189 = vector.extract_strided_slice %186 {offsets = [0, 256], sizes = [8, 128], strides = [1, 1]} : vector<8x384xf32> to vector<8x128xf32>
    %190 = vector.extract_strided_slice %178 {offsets = [0, 384], sizes = [8, 128], strides = [1, 1]} : vector<8x512xf32> to vector<8x128xf32>
    %191 = math.tanh %190 : vector<8x128xf32>
    %192 = arith.mulf %188, %167 : vector<8x128xf32>
    %193 = arith.mulf %187, %191 : vector<8x128xf32>
    %194 = arith.addf %192, %193 : vector<8x128xf32>
    %195 = math.tanh %194 : vector<8x128xf32>
    %196 = arith.mulf %189, %195 : vector<8x128xf32>
    %197 = vector.extract_strided_slice %196 {offsets = [0, 0], sizes = [8, 64], strides = [1, 1]} : vector<8x128xf32> to vector<8x64xf32>
    %c7_i32 = arith.constant 7 : i32
    %c8_i32_64 = arith.constant 8 : i32
    %198 = arith.muli %c7_i32, %c8_i32_64 : i32
    %199 = tpu.assume_multiple %198, 8 : i32
    %200 = arith.index_cast %199 : i32 to index
    %c0_65 = arith.constant 0 : index
    %201 = vector.load %arg7[%200, %c0_65] : memref<64x512xf32, #tpu.memory_space<vmem>>, vector<8x512xf32>
    %202 = arith.truncf %197 : vector<8x64xf32> to vector<8x64xbf16>
    %c0_66 = arith.constant 0 : index
    %c0_67 = arith.constant 0 : index
    %203 = vector.load %arg2[%c0_66, %c0_67] : memref<64x512xbf16, #tpu.memory_space<vmem>>, vector<64x512xbf16>
    %cst_68 = arith.constant dense<0.000000e+00> : vector<8x512xf32>
    %204 = tpu.matmul %202, %203, %cst_68 {dimension_numbers = #tpu.dot_dimension_numbers<[1], [0], [0], [1], [0, 0, 1, 1], [], []>} : vector<8x64xbf16>, vector<64x512xbf16>, vector<8x512xf32> -> vector<8x512xf32>
    %205 = arith.addf %201, %204 : vector<8x512xf32>
    %206 = vector.extract_strided_slice %205 {offsets = [0, 0], sizes = [8, 384], strides = [1, 1]} : vector<8x512xf32> to vector<8x384xf32>
    %cst_69 = arith.constant 5.000000e-01 : f32
    %207 = vector.broadcast %cst_69 : f32 to vector<8x384xf32>
    %208 = arith.mulf %207, %206 : vector<8x384xf32>
    %209 = math.tanh %208 : vector<8x384xf32>
    %cst_70 = arith.constant 5.000000e-01 : f32
    %210 = vector.broadcast %cst_70 : f32 to vector<8x384xf32>
    %211 = arith.mulf %210, %209 : vector<8x384xf32>
    %cst_71 = arith.constant 5.000000e-01 : f32
    %212 = vector.broadcast %cst_71 : f32 to vector<8x384xf32>
    %213 = arith.addf %211, %212 : vector<8x384xf32>
    %214 = vector.extract_strided_slice %213 {offsets = [0, 0], sizes = [8, 128], strides = [1, 1]} : vector<8x384xf32> to vector<8x128xf32>
    %215 = vector.extract_strided_slice %213 {offsets = [0, 128], sizes = [8, 128], strides = [1, 1]} : vector<8x384xf32> to vector<8x128xf32>
    %216 = vector.extract_strided_slice %213 {offsets = [0, 256], sizes = [8, 128], strides = [1, 1]} : vector<8x384xf32> to vector<8x128xf32>
    %217 = vector.extract_strided_slice %205 {offsets = [0, 384], sizes = [8, 128], strides = [1, 1]} : vector<8x512xf32> to vector<8x128xf32>
    %218 = math.tanh %217 : vector<8x128xf32>
    %219 = arith.mulf %215, %194 : vector<8x128xf32>
    %220 = arith.mulf %214, %218 : vector<8x128xf32>
    %221 = arith.addf %219, %220 : vector<8x128xf32>
    %222 = math.tanh %221 : vector<8x128xf32>
    %223 = arith.mulf %216, %222 : vector<8x128xf32>
    %224 = vector.extract_strided_slice %223 {offsets = [0, 0], sizes = [8, 64], strides = [1, 1]} : vector<8x128xf32> to vector<8x64xf32>
    %c8_i32_72 = arith.constant 8 : i32
    %225 = arith.truncf %224 : vector<8x64xf32> to vector<8x64xbf16>
    %c0_73 = arith.constant 0 : index
    %c0_74 = arith.constant 0 : index
    %226 = vector.load %arg4[%c0_73, %c0_74] : memref<64x128xbf16, #tpu.memory_space<vmem>>, vector<64x128xbf16>
    %cst_75 = arith.constant dense<0.000000e+00> : vector<8x128xf32>
    %227 = tpu.matmul %225, %226, %cst_75 {dimension_numbers = #tpu.dot_dimension_numbers<[1], [0], [0], [1], [0, 0, 1, 1], [], []>} : vector<8x64xbf16>, vector<64x128xbf16>, vector<8x128xf32> -> vector<8x128xf32>
    %c0_76 = arith.constant 0 : index
    %c0_77 = arith.constant 0 : index
    %228 = vector.load %arg5[%c0_76, %c0_77] : memref<1x128xf32, #tpu.memory_space<vmem>>, vector<1x128xf32>
    %229 = vector.broadcast %228 : vector<1x128xf32> to vector<8x128xf32>
    %230 = arith.addf %227, %229 : vector<8x128xf32>
    %c0_78 = arith.constant 0 : index
    %c0_79 = arith.constant 0 : index
    %231 = vector.load %arg6[%c0_78, %c0_79] : memref<8x128xf32, #tpu.memory_space<vmem>>, vector<8x128xf32>
    tpu.vector_store %arg6[%c0_78, %c0_79], %230 {strides = array<i32>} : memref<8x128xf32, #tpu.memory_space<vmem>>, vector<8x128xf32>,
    return
  }
}

</mosaic_0001>

<llo_original>
// kernel: rnn_forward.1
$region0: #{rnn_forward.1}
  #allocation0 [shape = 'u32[]', space=smem, size = 0x4, offset = 0x4, fixed_abs, tag = 'smem constant byte address 0x4 - core index']
  #allocation1 [shape = 'u32[72,128]{1,0:T(1,128)}', space=vmem, size = 0x9000, scoped, tag = 'internal scratch']
  #allocation2 [shape = 'f32[64,512]{1,0:T(8,128)}', space=vmem, size = 0x20000, scoped, tag = 'scratch operand']
  %s0 = inlined_call_operand.vmem [shape: bf16[64,28], index: 0, kind: input, shape index: {}]
  %s1 = inlined_call_operand.vmem [shape: bf16[28,512], index: 1, kind: input, shape index: {}]
  %s2 = inlined_call_operand.vmem [shape: bf16[64,512], index: 2, kind: input, shape index: {}]
  %s3 = inlined_call_operand.vmem [shape: f32[1,512], index: 3, kind: input, shape index: {}]
  %s4 = inlined_call_operand.vmem [shape: bf16[64,128], index: 4, kind: input, shape index: {}]
  %s5 = inlined_call_operand.vmem [shape: f32[1,128], index: 5, kind: input, shape index: {}]
  %s6 = inlined_call_operand.vmem [shape: f32[8,128], index: 6, kind: output, shape index: {}]
  %s7 = sld [smem:[#allocation0]]
  $region34: #{rnn_forward.1} parent=0
    _
  %s9 = ssub.s32 1, %s7
  %s10 = scalar_select 0, %s9, %s7
  // Predicated region
  $region2: #{rnn_forward.1} parent=0 // pred_check
    _
  $region3: #{rnn_forward.1} parent=0 // pred_check_branch
    %12 = sbr.rel (0) target = $region5
  $region4: #{rnn_forward.1} parent=0 // pred_region
    _
  $region5: #{rnn_forward.1} parent=0 // pred_fallthru
    _
  // Predicated region
  $region6: #{rnn_forward.1} parent=0 // pred_check
    _
  $region7: #{rnn_forward.1} parent=0 // pred_check_branch
    %14 = sbr.rel (0) target = $region9
  $region8: #{rnn_forward.1} parent=0 // pred_region
    _
  $region9: #{rnn_forward.1} parent=0 // pred_fallthru
    _
  // Predicated region
  $region10: #{rnn_forward.1} parent=0 // pred_check
    _
  $region11: #{rnn_forward.1} parent=0 // pred_check_branch
    %16 = sbr.rel (0) target = $region13
  $region12: #{rnn_forward.1} parent=0 // pred_region
    _
  $region13: #{rnn_forward.1} parent=0 // pred_fallthru
    _
  // Predicated region
  $region14: #{rnn_forward.1} parent=0 // pred_check
    _
  $region15: #{rnn_forward.1} parent=0 // pred_check_branch
    %18 = sbr.rel (0) target = $region17
  $region16: #{rnn_forward.1} parent=0 // pred_region
    _
  $region17: #{rnn_forward.1} parent=0 // pred_fallthru
    _
  // Predicated region
  $region18: #{rnn_forward.1} parent=0 // pred_check
    _
  $region19: #{rnn_forward.1} parent=0 // pred_check_branch
    %20 = sbr.rel (0) target = $region21
  $region20: #{rnn_forward.1} parent=0 // pred_region
    _
  $region21: #{rnn_forward.1} parent=0 // pred_fallthru
    _
  // Predicated region
  $region22: #{rnn_forward.1} parent=0 // pred_check
    _
  $region23: #{rnn_forward.1} parent=0 // pred_check_branch
    %22 = sbr.rel (0) target = $region25
  $region24: #{rnn_forward.1} parent=0 // pred_region
    _
  $region25: #{rnn_forward.1} parent=0 // pred_fallthru
    _
  %v24 = vld [vmem:[%s0] sm:$0xf]
  %v25 = vld [vmem:[%s0 + $0x4] sm:$0xf]
  %v26 = vld [vmem:[%s0 + $0x8] sm:$0xf]
  %v27 = vld [vmem:[%s0 + $0xc] sm:$0xf]
  %v28 = vld [vmem:[%s0 + $0x10] sm:$0xf]
  %v29 = vld [vmem:[%s0 + $0x14] sm:$0xf]
  %v30 = vld [vmem:[%s0 + $0x18] sm:$0xf]
  %v31 = vld [vmem:[%s0 + $0x1c] sm:$0xf]
  %v32 = vld [vmem:[%s1] sm:$0xff]
  %v33 = vld [vmem:[%s1 + $0x8] sm:$0xff]
  %v34 = vld [vmem:[%s1 + $0x10] sm:$0xff]
  %v35 = vld [vmem:[%s1 + $0x18] sm:$0xff]
  %v36 = vld [vmem:[%s1 + $0x20] sm:$0xff]
  %v37 = vld [vmem:[%s1 + $0x28] sm:$0xff]
  %v38 = vld [vmem:[%s1 + $0x30] sm:$0x33]
  %v39 = vld [vmem:[%s1 + $0x38] sm:$0x33]
  %v40 = vld [vmem:[%s3] sm:$0xf]
  %v42 = vperm.slane %v40, 0
  %v43 = vperm.slane %v40, 1
  %v44 = vperm.slane %v40, 2
  %v45 = vperm.slane %v40, 3
  %v58 = vunpack.c.l.b16 %v24
  %v59 = vunpack.c.l.b16 %v25
  %v60 = vunpack.c.l.b16 %v26
  %v61 = vunpack.c.l.b16 %v27
  %v62 = vunpack.c.l.b16 %v28
  %v63 = vunpack.c.l.b16 %v29
  %v64 = vunpack.c.l.b16 %v30
  %v65 = vunpack.c.l.b16 %v31
  %v66 = vpack.c.b16 %v59, %v58
  %v67 = vpack.c.b16 %v61, %v60
  %v68 = vpack.c.b16 %v63, %v62
  %v69 = vpack.c.b16 %v65, %v64
  %v78 = vunpack.c.l.b16 %v32
  %v79 = vunpack.c.h.b16 %v32
  %v80 = vunpack.c.l.b16 %v33
  %v81 = vunpack.c.h.b16 %v33
  %v82 = vunpack.c.l.b16 %v34
  %v83 = vunpack.c.h.b16 %v34
  %v84 = vunpack.c.l.b16 %v35
  %v85 = vunpack.c.h.b16 %v35
  %v86 = vunpack.c.l.b16 %v36
  %v87 = vunpack.c.h.b16 %v36
  %v88 = vunpack.c.l.b16 %v37
  %v89 = vunpack.c.h.b16 %v37
  %v90 = vunpack.c.l.b16 %v38
  %v91 = vunpack.c.h.b16 %v38
  %v92 = vunpack.c.l.b16 %v39
  %v93 = vunpack.c.h.b16 %v39
  %v94 = vpack.c.b16 %v82, %v78
  %v95 = vpack.c.b16 %v83, %v79
  %v96 = vpack.c.b16 %v84, %v80
  %v97 = vpack.c.b16 %v85, %v81
  %v98 = vpack.c.b16 %v90, %v86
  %v99 = vpack.c.b16 %v91, %v87
  %v100 = vpack.c.b16 %v92, %v88
  %v101 = vpack.c.b16 %v93, %v89
  %vm106 = vcmask 228352
  %v108 = vsel %vm106, %v66, 0
  %v111 = vsel %vm106, %v67, 0
  %v114 = vsel %vm106, %v68, 0
  %v117 = vsel %vm106, %v69, 0
  %vm119 = vcmask 1045504
  %v121 = vsel %vm119, %v98, 0
  %v124 = vsel %vm119, %v99, 0
  %v127 = vsel %vm119, %v100, 0
  %v130 = vsel %vm119, %v101, 0
  %132 = vmatpush.bf16.msra.mxu0 0
  %133 = vmatpush.bf16.msra.mxu0 0
  %134 = vmatpush.bf16.msra.mxu0 0
  %135 = vmatpush.bf16.msra.mxu0 0
  %136 = vmatpush.bf16.msra.mxu0 0
  %137 = vmatpush.bf16.msra.mxu0 0
  %138 = vmatpush.bf16.msra.mxu0 %v121
  %139 = vmatpush.bf16.msra.mxu0 %v94
  %140 = vmatmul.bf16.gmra.mxu0 %v108
  %v141 = vpop.f32.mrf.mxu0
  %v142 = vadd.f32 %v42, %v141
  %v143 = vpop.f32.mrf.mxu0
  %v144 = vadd.f32 %v42, %v143
  %145 = vmatmul.bf16.gmra.mxu0 %v111
  %v146 = vpop.f32.mrf.mxu0
  %v147 = vadd.f32 %v42, %v146
  %v148 = vpop.f32.mrf.mxu0
  %v149 = vadd.f32 %v42, %v148
  %150 = vmatmul.bf16.gmra.mxu0 %v114
  %v151 = vpop.f32.mrf.mxu0
  %v152 = vadd.f32 %v42, %v151
  %v153 = vpop.f32.mrf.mxu0
  %v154 = vadd.f32 %v42, %v153
  %155 = vmatmul.bf16.gmra.mxu0 %v117
  %v156 = vpop.f32.mrf.mxu0
  %v157 = vadd.f32 %v42, %v156
  %v158 = vpop.f32.mrf.mxu0
  %v159 = vadd.f32 %v42, %v158
  %160 = vdwg.mxu0
  %161 = vmatpush.bf16.msra.mxu0 0
  %162 = vmatpush.bf16.msra.mxu0 0
  %163 = vmatpush.bf16.msra.mxu0 0
  %164 = vmatpush.bf16.msra.mxu0 0
  %165 = vmatpush.bf16.msra.mxu0 0
  %166 = vmatpush.bf16.msra.mxu0 0
  %167 = vmatpush.bf16.msra.mxu0 %v124
  %168 = vmatpush.bf16.msra.mxu0 %v95
  %169 = vmatmul.bf16.gmra.mxu0 %v108
  %v170 = vpop.f32.mrf.mxu0
  %v171 = vadd.f32 %v43, %v170
  %v172 = vpop.f32.mrf.mxu0
  %v173 = vadd.f32 %v43, %v172
  %174 = vmatmul.bf16.gmra.mxu0 %v111
  %v175 = vpop.f32.mrf.mxu0
  %v176 = vadd.f32 %v43, %v175
  %v177 = vpop.f32.mrf.mxu0
  %v178 = vadd.f32 %v43, %v177
  %179 = vmatmul.bf16.gmra.mxu0 %v114
  %v180 = vpop.f32.mrf.mxu0
  %v181 = vadd.f32 %v43, %v180
  %v182 = vpop.f32.mrf.mxu0
  %v183 = vadd.f32 %v43, %v182
  %184 = vmatmul.bf16.gmra.mxu0 %v117
  %v185 = vpop.f32.mrf.mxu0
  %v186 = vadd.f32 %v43, %v185
  %v187 = vpop.f32.mrf.mxu0
  %v188 = vadd.f32 %v43, %v187
  %189 = vdwg.mxu0
  %190 = vmatpush.bf16.msra.mxu0 0
  %191 = vmatpush.bf16.msra.mxu0 0
  %192 = vmatpush.bf16.msra.mxu0 0
  %193 = vmatpush.bf16.msra.mxu0 0
  %194 = vmatpush.bf16.msra.mxu0 0
  %195 = vmatpush.bf16.msra.mxu0 0
  %196 = vmatpush.bf16.msra.mxu0 %v127
  %197 = vmatpush.bf16.msra.mxu0 %v96
  %198 = vmatmul.bf16.gmra.mxu0 %v108
  %v199 = vpop.f32.mrf.mxu0
  %v200 = vadd.f32 %v44, %v199
  %v201 = vpop.f32.mrf.mxu0
  %v202 = vadd.f32 %v44, %v201
  %203 = vmatmul.bf16.gmra.mxu0 %v111
  %v204 = vpop.f32.mrf.mxu0
  %v205 = vadd.f32 %v44, %v204
  %v206 = vpop.f32.mrf.mxu0
  %v207 = vadd.f32 %v44, %v206
  %208 = vmatmul.bf16.gmra.mxu0 %v114
  %v209 = vpop.f32.mrf.mxu0
  %v210 = vadd.f32 %v44, %v209
  %v211 = vpop.f32.mrf.mxu0
  %v212 = vadd.f32 %v44, %v211
  %213 = vmatmul.bf16.gmra.mxu0 %v117
  %v214 = vpop.f32.mrf.mxu0
  %v215 = vadd.f32 %v44, %v214
  %v216 = vpop.f32.mrf.mxu0
  %v217 = vadd.f32 %v44, %v216
  %218 = vdwg.mxu0
  %219 = vmatpush.bf16.msra.mxu0 0
  %220 = vmatpush.bf16.msra.mxu0 0
  %221 = vmatpush.bf16.msra.mxu0 0
  %222 = vmatpush.bf16.msra.mxu0 0
  %223 = vmatpush.bf16.msra.mxu0 0
  %224 = vmatpush.bf16.msra.mxu0 0
  %225 = vmatpush.bf16.msra.mxu0 %v130
  %226 = vmatpush.bf16.msra.mxu0 %v97
  %227 = vmatmul.bf16.gmra.mxu0 %v108
  %v228 = vpop.f32.mrf.mxu0
  %v229 = vadd.f32 %v45, %v228
  %v230 = vpop.f32.mrf.mxu0
  %v231 = vadd.f32 %v45, %v230
  %232 = vmatmul.bf16.gmra.mxu0 %v111
  %v233 = vpop.f32.mrf.mxu0
  %v234 = vadd.f32 %v45, %v233
  %v235 = vpop.f32.mrf.mxu0
  %v236 = vadd.f32 %v45, %v235
  %237 = vmatmul.bf16.gmra.mxu0 %v114
  %v238 = vpop.f32.mrf.mxu0
  %v239 = vadd.f32 %v45, %v238
  %v240 = vpop.f32.mrf.mxu0
  %v241 = vadd.f32 %v45, %v240
  %242 = vmatmul.bf16.gmra.mxu0 %v117
  %v243 = vpop.f32.mrf.mxu0
  %v244 = vadd.f32 %v45, %v243
  %v245 = vpop.f32.mrf.mxu0
  %v246 = vadd.f32 %v45, %v245
  %247 = vdwg.mxu0
  %248 = vst [vmem:[#allocation2] sm:$0xff] %v142
  %249 = vst [vmem:[#allocation2 + $0x8] sm:$0xff] %v171
  %250 = vst [vmem:[#allocation2 + $0x10] sm:$0xff] %v200
  %251 = vst [vmem:[#allocation2 + $0x18] sm:$0xff] %v229
  %252 = vst [vmem:[#allocation2 + $0x20] sm:$0xff] %v144
  %253 = vst [vmem:[#allocation2 + $0x28] sm:$0xff] %v173
  %254 = vst [vmem:[#allocation2 + $0x30] sm:$0xff] %v202
  %255 = vst [vmem:[#allocation2 + $0x38] sm:$0xff] %v231
  %256 = vst [vmem:[#allocation2 + $0x40] sm:$0xff] %v147
  %257 = vst [vmem:[#allocation2 + $0x48] sm:$0xff] %v176
  %258 = vst [vmem:[#allocation2 + $0x50] sm:$0xff] %v205
  %259 = vst [vmem:[#allocation2 + $0x58] sm:$0xff] %v234
  %260 = vst [vmem:[#allocation2 + $0x60] sm:$0xff] %v149
  %261 = vst [vmem:[#allocation2 + $0x68] sm:$0xff] %v178
  %262 = vst [vmem:[#allocation2 + $0x70] sm:$0xff] %v207
  %263 = vst [vmem:[#allocation2 + $0x78] sm:$0xff] %v236
  %264 = vst [vmem:[#allocation2 + $0x80] sm:$0xff] %v152
  %265 = vst [vmem:[#allocation2 + $0x88] sm:$0xff] %v181
  %266 = vst [vmem:[#allocation2 + $0x90] sm:$0xff] %v210
  %267 = vst [vmem:[#allocation2 + $0x98] sm:$0xff] %v239
  %268 = vst [vmem:[#allocation2 + $0xa0] sm:$0xff] %v154
  %269 = vst [vmem:[#allocation2 + $0xa8] sm:$0xff] %v183
  %270 = vst [vmem:[#allocation2 + $0xb0] sm:$0xff] %v212
  %271 = vst [vmem:[#allocation2 + $0xb8] sm:$0xff] %v241
  %272 = vst [vmem:[#allocation2 + $0xc0] sm:$0xff] %v157
  %273 = vst [vmem:[#allocation2 + $0xc8] sm:$0xff] %v186
  %274 = vst [vmem:[#allocation2 + $0xd0] sm:$0xff] %v215
  %275 = vst [vmem:[#allocation2 + $0xd8] sm:$0xff] %v244
  %276 = vst [vmem:[#allocation2 + $0xe0] sm:$0xff] %v159
  %277 = vst [vmem:[#allocation2 + $0xe8] sm:$0xff] %v188
  %278 = vst [vmem:[#allocation2 + $0xf0] sm:$0xff] %v217
  %279 = vst [vmem:[#allocation2 + $0xf8] sm:$0xff] %v246
  %s280 = smul.u32 0, 4
  %s281 = smul.addr %s280, 8
  %s282 = scalar_lea.vmem [#allocation2], %s281
  %v283 = vld [vmem:[%s282] sm:$0xff]
  %v284 = vld [vmem:[%s282 + $0x8] sm:$0xff]
  %v285 = vld [vmem:[%s282 + $0x10] sm:$0xff]
  %v286 = vld [vmem:[%s282 + $0x18] sm:$0xff]
  %v287 = vld [vmem:[%s2] sm:$0xff]
  %v288 = vld [vmem:[%s2 + $0x8] sm:$0xff]
  %v289 = vld [vmem:[%s2 + $0x10] sm:$0xff]
  %v290 = vld [vmem:[%s2 + $0x18] sm:$0xff]
  %v291 = vld [vmem:[%s2 + $0x20] sm:$0xff]
  %v292 = vld [vmem:[%s2 + $0x28] sm:$0xff]
  %v293 = vld [vmem:[%s2 + $0x30] sm:$0xff]
  %v294 = vld [vmem:[%s2 + $0x38] sm:$0xff]
  %v295 = vld [vmem:[%s2 + $0x40] sm:$0xff]
  %v296 = vld [vmem:[%s2 + $0x48] sm:$0xff]
  %v297 = vld [vmem:[%s2 + $0x50] sm:$0xff]
  %v298 = vld [vmem:[%s2 + $0x58] sm:$0xff]
  %v299 = vld [vmem:[%s2 + $0x60] sm:$0xff]
  %v300 = vld [vmem:[%s2 + $0x68] sm:$0xff]
  %v301 = vld [vmem:[%s2 + $0x70] sm:$0xff]
  %v302 = vld [vmem:[%s2 + $0x78] sm:$0xff]
  %v319 = vunpack.c.l.b16 %v287
  %v320 = vunpack.c.h.b16 %v287
  %v321 = vunpack.c.l.b16 %v288
  %v322 = vunpack.c.h.b16 %v288
  %v323 = vunpack.c.l.b16 %v289
  %v324 = vunpack.c.h.b16 %v289
  %v325 = vunpack.c.l.b16 %v290
  %v326 = vunpack.c.h.b16 %v290
  %v327 = vunpack.c.l.b16 %v291
  %v328 = vunpack.c.h.b16 %v291
  %v329 = vunpack.c.l.b16 %v292
  %v330 = vunpack.c.h.b16 %v292
  %v331 = vunpack.c.l.b16 %v293
  %v332 = vunpack.c.h.b16 %v293
  %v333 = vunpack.c.l.b16 %v294
  %v334 = vunpack.c.h.b16 %v294
  %v335 = vunpack.c.l.b16 %v295
  %v336 = vunpack.c.h.b16 %v295
  %v337 = vunpack.c.l.b16 %v296
  %v338 = vunpack.c.h.b16 %v296
  %v339 = vunpack.c.l.b16 %v297
  %v340 = vunpack.c.h.b16 %v297
  %v341 = vunpack.c.l.b16 %v298
  %v342 = vunpack.c.h.b16 %v298
  %v343 = vunpack.c.l.b16 %v299
  %v344 = vunpack.c.h.b16 %v299
  %v345 = vunpack.c.l.b16 %v300
  %v346 = vunpack.c.h.b16 %v300
  %v347 = vunpack.c.l.b16 %v301
  %v348 = vunpack.c.h.b16 %v301
  %v349 = vunpack.c.l.b16 %v302
  %v350 = vunpack.c.h.b16 %v302
  %v351 = vpack.c.b16 %v323, %v319
  %v352 = vpack.c.b16 %v324, %v320
  %v353 = vpack.c.b16 %v325, %v321
  %v354 = vpack.c.b16 %v326, %v322
  %v355 = vpack.c.b16 %v331, %v327
  %v356 = vpack.c.b16 %v332, %v328
  %v357 = vpack.c.b16 %v333, %v329
  %v358 = vpack.c.b16 %v334, %v330
  %v359 = vpack.c.b16 %v339, %v335
  %v360 = vpack.c.b16 %v340, %v336
  %v361 = vpack.c.b16 %v341, %v337
  %v362 = vpack.c.b16 %v342, %v338
  %v363 = vpack.c.b16 %v347, %v343
  %v364 = vpack.c.b16 %v348, %v344
  %v365 = vpack.c.b16 %v349, %v345
  %v366 = vpack.c.b16 %v350, %v346
  %vm383 = vcmask 523264
  %v385 = vsel %vm383, 0, 0
  %387 = vmatpush.bf16.msra.mxu0 0
  %388 = vmatpush.bf16.msra.mxu0 0
  %389 = vmatpush.bf16.msra.mxu0 0
  %390 = vmatpush.bf16.msra.mxu0 0
  %391 = vmatpush.bf16.msra.mxu0 %v363
  %392 = vmatpush.bf16.msra.mxu0 %v359
  %393 = vmatpush.bf16.msra.mxu0 %v355
  %394 = vmatpush.bf16.msra.mxu0 %v351
  %395 = vmatmul.bf16.gmra.mxu0 %v385
  %v396 = vpop.f32.mrf.mxu0
  %v397 = vadd.f32 0.0, %v396
  %v398 = vpop.f32.mrf.mxu0
  %399 = vdwg.mxu0
  %400 = vmatpush.bf16.msra.mxu0 0
  %401 = vmatpush.bf16.msra.mxu0 0
  %402 = vmatpush.bf16.msra.mxu0 0
  %403 = vmatpush.bf16.msra.mxu0 0
  %404 = vmatpush.bf16.msra.mxu0 %v364
  %405 = vmatpush.bf16.msra.mxu0 %v360
  %406 = vmatpush.bf16.msra.mxu0 %v356
  %407 = vmatpush.bf16.msra.mxu0 %v352
  %408 = vmatmul.bf16.gmra.mxu0 %v385
  %v409 = vpop.f32.mrf.mxu0
  %v410 = vadd.f32 0.0, %v409
  %v411 = vpop.f32.mrf.mxu0
  %412 = vdwg.mxu0
  %413 = vmatpush.bf16.msra.mxu0 0
  %414 = vmatpush.bf16.msra.mxu0 0
  %415 = vmatpush.bf16.msra.mxu0 0
  %416 = vmatpush.bf16.msra.mxu0 0
  %417 = vmatpush.bf16.msra.mxu0 %v365
  %418 = vmatpush.bf16.msra.mxu0 %v361
  %419 = vmatpush.bf16.msra.mxu0 %v357
  %420 = vmatpush.bf16.msra.mxu0 %v353
  %421 = vmatmul.bf16.gmra.mxu0 %v385
  %v422 = vpop.f32.mrf.mxu0
  %v423 = vadd.f32 0.0, %v422
  %v424 = vpop.f32.mrf.mxu0
  %425 = vdwg.mxu0
  %426 = vmatpush.bf16.msra.mxu0 0
  %427 = vmatpush.bf16.msra.mxu0 0
  %428 = vmatpush.bf16.msra.mxu0 0
  %429 = vmatpush.bf16.msra.mxu0 0
  %430 = vmatpush.bf16.msra.mxu0 %v366
  %431 = vmatpush.bf16.msra.mxu0 %v362
  %432 = vmatpush.bf16.msra.mxu0 %v358
  %433 = vmatpush.bf16.msra.mxu0 %v354
  %434 = vmatmul.bf16.gmra.mxu0 %v385
  %v435 = vpop.f32.mrf.mxu0
  %v436 = vadd.f32 0.0, %v435
  %v437 = vpop.f32.mrf.mxu0
  %438 = vdwg.mxu0
  %v439 = vadd.f32 %v283, %v397
  %v440 = vadd.f32 %v284, %v410
  %v441 = vadd.f32 %v285, %v423
  %v442 = vadd.f32 %v286, %v436
  %v443 = vmul.f32 %v439, 0.5
  %v444 = vmul.f32 %v440, 0.5
  %v445 = vmul.f32 %v441, 0.5
  %v446 = vtanh.pop %v443
  %v447 = vtanh.pop %v444
  %v448 = vtanh.pop %v445
  %v449 = vmul.f32 %v446, 0.5
  %v450 = vmul.f32 %v447, 0.5
  %v451 = vmul.f32 %v448, 0.5
  %v452 = vadd.f32 %v449, 0.5
  %v453 = vadd.f32 %v450, 0.5
  %v454 = vadd.f32 %v451, 0.5
  %v455 = vtanh.pop %v442
  %v456 = vmul.f32 %v453, 0.0
  %v457 = vmul.f32 %v452, %v455
  %v458 = vadd.f32 %v456, %v457
  %v459 = vtanh.pop %v458
  %v460 = vmul.f32 %v454, %v459
  %s461 = smul.u32 1, 4
  %s462 = smul.addr %s461, 8
  %s463 = scalar_lea.vmem [#allocation2], %s462
  %v464 = vld [vmem:[%s463] sm:$0xff]
  %v465 = vld [vmem:[%s463 + $0x8] sm:$0xff]
  %v466 = vld [vmem:[%s463 + $0x10] sm:$0xff]
  %v467 = vld [vmem:[%s463 + $0x18] sm:$0xff]
  %v468 = vpack.c.bf16 %v460, %v460
  %v470 = vsel %vm383, %v468, 0
  %472 = vmatpush.bf16.msra.mxu0 0
  %473 = vmatpush.bf16.msra.mxu0 0
  %474 = vmatpush.bf16.msra.mxu0 0
  %475 = vmatpush.bf16.msra.mxu0 0
  %476 = vmatpush.bf16.msra.mxu0 %v363
  %477 = vmatpush.bf16.msra.mxu0 %v359
  %478 = vmatpush.bf16.msra.mxu0 %v355
  %479 = vmatpush.bf16.msra.mxu0 %v351
  %480 = vmatmul.bf16.gmra.mxu0 %v470
  %v481 = vpop.f32.mrf.mxu0
  %v482 = vadd.f32 0.0, %v481
  %v483 = vpop.f32.mrf.mxu0
  %484 = vdwg.mxu0
  %485 = vmatpush.bf16.msra.mxu0 0
  %486 = vmatpush.bf16.msra.mxu0 0
  %487 = vmatpush.bf16.msra.mxu0 0
  %488 = vmatpush.bf16.msra.mxu0 0
  %489 = vmatpush.bf16.msra.mxu0 %v364
  %490 = vmatpush.bf16.msra.mxu0 %v360
  %491 = vmatpush.bf16.msra.mxu0 %v356
  %492 = vmatpush.bf16.msra.mxu0 %v352
  %493 = vmatmul.bf16.gmra.mxu0 %v470
  %v494 = vpop.f32.mrf.mxu0
  %v495 = vadd.f32 0.0, %v494
  %v496 = vpop.f32.mrf.mxu0
  %497 = vdwg.mxu0
  %498 = vmatpush.bf16.msra.mxu0 0
  %499 = vmatpush.bf16.msra.mxu0 0
  %500 = vmatpush.bf16.msra.mxu0 0
  %501 = vmatpush.bf16.msra.mxu0 0
  %502 = vmatpush.bf16.msra.mxu0 %v365
  %503 = vmatpush.bf16.msra.mxu0 %v361
  %504 = vmatpush.bf16.msra.mxu0 %v357
  %505 = vmatpush.bf16.msra.mxu0 %v353
  %506 = vmatmul.bf16.gmra.mxu0 %v470
  %v507 = vpop.f32.mrf.mxu0
  %v508 = vadd.f32 0.0, %v507
  %v509 = vpop.f32.mrf.mxu0
  %510 = vdwg.mxu0
  %511 = vmatpush.bf16.msra.mxu0 0
  %512 = vmatpush.bf16.msra.mxu0 0
  %513 = vmatpush.bf16.msra.mxu0 0
  %514 = vmatpush.bf16.msra.mxu0 0
  %515 = vmatpush.bf16.msra.mxu0 %v366
  %516 = vmatpush.bf16.msra.mxu0 %v362
  %517 = vmatpush.bf16.msra.mxu0 %v358
  %518 = vmatpush.bf16.msra.mxu0 %v354
  %519 = vmatmul.bf16.gmra.mxu0 %v470
  %v520 = vpop.f32.mrf.mxu0
  %v521 = vadd.f32 0.0, %v520
  %v522 = vpop.f32.mrf.mxu0
  %523 = vdwg.mxu0
  %v524 = vadd.f32 %v464, %v482
  %v525 = vadd.f32 %v465, %v495
  %v526 = vadd.f32 %v466, %v508
  %v527 = vadd.f32 %v467, %v521
  %v528 = vmul.f32 %v524, 0.5
  %v529 = vmul.f32 %v525, 0.5
  %v530 = vmul.f32 %v526, 0.5
  %v531 = vtanh.pop %v528
  %v532 = vtanh.pop %v529
  %v533 = vtanh.pop %v530
  %v534 = vmul.f32 %v531, 0.5
  %v535 = vmul.f32 %v532, 0.5
  %v536 = vmul.f32 %v533, 0.5
  %v537 = vadd.f32 %v534, 0.5
  %v538 = vadd.f32 %v535, 0.5
  %v539 = vadd.f32 %v536, 0.5
  %v540 = vtanh.pop %v527
  %v541 = vmul.f32 %v538, %v458
  %v542 = vmul.f32 %v537, %v540
  %v543 = vadd.f32 %v541, %v542
  %v544 = vtanh.pop %v543
  %v545 = vmul.f32 %v539, %v544
  %s546 = smul.u32 2, 4
  %s547 = smul.addr %s546, 8
  %s548 = scalar_lea.vmem [#allocation2], %s547
  %v549 = vld [vmem:[%s548] sm:$0xff]
  %v550 = vld [vmem:[%s548 + $0x8] sm:$0xff]
  %v551 = vld [vmem:[%s548 + $0x10] sm:$0xff]
  %v552 = vld [vmem:[%s548 + $0x18] sm:$0xff]
  %v553 = vpack.c.bf16 %v545, %v545
  %v555 = vsel %vm383, %v553, 0
  %557 = vmatpush.bf16.msra.mxu0 0
  %558 = vmatpush.bf16.msra.mxu0 0
  %559 = vmatpush.bf16.msra.mxu0 0
  %560 = vmatpush.bf16.msra.mxu0 0
  %561 = vmatpush.bf16.msra.mxu0 %v363
  %562 = vmatpush.bf16.msra.mxu0 %v359
  %563 = vmatpush.bf16.msra.mxu0 %v355
  %564 = vmatpush.bf16.msra.mxu0 %v351
  %565 = vmatmul.bf16.gmra.mxu0 %v555
  %v566 = vpop.f32.mrf.mxu0
  %v567 = vadd.f32 0.0, %v566
  %v568 = vpop.f32.mrf.mxu0
  %569 = vdwg.mxu0
  %570 = vmatpush.bf16.msra.mxu0 0
  %571 = vmatpush.bf16.msra.mxu0 0
  %572 = vmatpush.bf16.msra.mxu0 0
  %573 = vmatpush.bf16.msra.mxu0 0
  %574 = vmatpush.bf16.msra.mxu0 %v364
  %575 = vmatpush.bf16.msra.mxu0 %v360
  %576 = vmatpush.bf16.msra.mxu0 %v356
  %577 = vmatpush.bf16.msra.mxu0 %v352
  %578 = vmatmul.bf16.gmra.mxu0 %v555
  %v579 = vpop.f32.mrf.mxu0
  %v580 = vadd.f32 0.0, %v579
  %v581 = vpop.f32.mrf.mxu0
  %582 = vdwg.mxu0
  %583 = vmatpush.bf16.msra.mxu0 0
  %584 = vmatpush.bf16.msra.mxu0 0
  %585 = vmatpush.bf16.msra.mxu0 0
  %586 = vmatpush.bf16.msra.mxu0 0
  %587 = vmatpush.bf16.msra.mxu0 %v365
  %588 = vmatpush.bf16.msra.mxu0 %v361
  %589 = vmatpush.bf16.msra.mxu0 %v357
  %590 = vmatpush.bf16.msra.mxu0 %v353
  %591 = vmatmul.bf16.gmra.mxu0 %v555
  %v592 = vpop.f32.mrf.mxu0
  %v593 = vadd.f32 0.0, %v592
  %v594 = vpop.f32.mrf.mxu0
  %595 = vdwg.mxu0
  %596 = vmatpush.bf16.msra.mxu0 0
  %597 = vmatpush.bf16.msra.mxu0 0
  %598 = vmatpush.bf16.msra.mxu0 0
  %599 = vmatpush.bf16.msra.mxu0 0
  %600 = vmatpush.bf16.msra.mxu0 %v366
  %601 = vmatpush.bf16.msra.mxu0 %v362
  %602 = vmatpush.bf16.msra.mxu0 %v358
  %603 = vmatpush.bf16.msra.mxu0 %v354
  %604 = vmatmul.bf16.gmra.mxu0 %v555
  %v605 = vpop.f32.mrf.mxu0
  %v606 = vadd.f32 0.0, %v605
  %v607 = vpop.f32.mrf.mxu0
  %608 = vdwg.mxu0
  %v609 = vadd.f32 %v549, %v567
  %v610 = vadd.f32 %v550, %v580
  %v611 = vadd.f32 %v551, %v593
  %v612 = vadd.f32 %v552, %v606
  %v613 = vmul.f32 %v609, 0.5
  %v614 = vmul.f32 %v610, 0.5
  %v615 = vmul.f32 %v611, 0.5
  %v616 = vtanh.pop %v613
  %v617 = vtanh.pop %v614
  %v618 = vtanh.pop %v615
  %v619 = vmul.f32 %v616, 0.5
  %v620 = vmul.f32 %v617, 0.5
  %v621 = vmul.f32 %v618, 0.5
  %v622 = vadd.f32 %v619, 0.5
  %v623 = vadd.f32 %v620, 0.5
  %v624 = vadd.f32 %v621, 0.5
  %v625 = vtanh.pop %v612
  %v626 = vmul.f32 %v623, %v543
  %v627 = vmul.f32 %v622, %v625
  %v628 = vadd.f32 %v626, %v627
  %v629 = vtanh.pop %v628
  %v630 = vmul.f32 %v624, %v629
  %s631 = smul.u32 3, 4
  %s632 = smul.addr %s631, 8
  %s633 = scalar_lea.vmem [#allocation2], %s632
  %v634 = vld [vmem:[%s633] sm:$0xff]
  %v635 = vld [vmem:[%s633 + $0x8] sm:$0xff]
  %v636 = vld [vmem:[%s633 + $0x10] sm:$0xff]
  %v637 = vld [vmem:[%s633 + $0x18] sm:$0xff]
  %v638 = vpack.c.bf16 %v630, %v630
  %v640 = vsel %vm383, %v638, 0
  %642 = vmatpush.bf16.msra.mxu0 0
  %643 = vmatpush.bf16.msra.mxu0 0
  %644 = vmatpush.bf16.msra.mxu0 0
  %645 = vmatpush.bf16.msra.mxu0 0
  %646 = vmatpush.bf16.msra.mxu0 %v363
  %647 = vmatpush.bf16.msra.mxu0 %v359
  %648 = vmatpush.bf16.msra.mxu0 %v355
  %649 = vmatpush.bf16.msra.mxu0 %v351
  %650 = vmatmul.bf16.gmra.mxu0 %v640
  %v651 = vpop.f32.mrf.mxu0
  %v652 = vadd.f32 0.0, %v651
  %v653 = vpop.f32.mrf.mxu0
  %654 = vdwg.mxu0
  %655 = vmatpush.bf16.msra.mxu0 0
  %656 = vmatpush.bf16.msra.mxu0 0
  %657 = vmatpush.bf16.msra.mxu0 0
  %658 = vmatpush.bf16.msra.mxu0 0
  %659 = vmatpush.bf16.msra.mxu0 %v364
  %660 = vmatpush.bf16.msra.mxu0 %v360
  %661 = vmatpush.bf16.msra.mxu0 %v356
  %662 = vmatpush.bf16.msra.mxu0 %v352
  %663 = vmatmul.bf16.gmra.mxu0 %v640
  %v664 = vpop.f32.mrf.mxu0
  %v665 = vadd.f32 0.0, %v664
  %v666 = vpop.f32.mrf.mxu0
  %667 = vdwg.mxu0
  %668 = vmatpush.bf16.msra.mxu0 0
  %669 = vmatpush.bf16.msra.mxu0 0
  %670 = vmatpush.bf16.msra.mxu0 0
  %671 = vmatpush.bf16.msra.mxu0 0
  %672 = vmatpush.bf16.msra.mxu0 %v365
  %673 = vmatpush.bf16.msra.mxu0 %v361
  %674 = vmatpush.bf16.msra.mxu0 %v357
  %675 = vmatpush.bf16.msra.mxu0 %v353
  %676 = vmatmul.bf16.gmra.mxu0 %v640
  %v677 = vpop.f32.mrf.mxu0
  %v678 = vadd.f32 0.0, %v677
  %v679 = vpop.f32.mrf.mxu0
  %680 = vdwg.mxu0
  %681 = vmatpush.bf16.msra.mxu0 0
  %682 = vmatpush.bf16.msra.mxu0 0
  %683 = vmatpush.bf16.msra.mxu0 0
  %684 = vmatpush.bf16.msra.mxu0 0
  %685 = vmatpush.bf16.msra.mxu0 %v366
  %686 = vmatpush.bf16.msra.mxu0 %v362
  %687 = vmatpush.bf16.msra.mxu0 %v358
  %688 = vmatpush.bf16.msra.mxu0 %v354
  %689 = vmatmul.bf16.gmra.mxu0 %v640
  %v690 = vpop.f32.mrf.mxu0
  %v691 = vadd.f32 0.0, %v690
  %v692 = vpop.f32.mrf.mxu0
  %693 = vdwg.mxu0
  %v694 = vadd.f32 %v634, %v652
  %v695 = vadd.f32 %v635, %v665
  %v696 = vadd.f32 %v636, %v678
  %v697 = vadd.f32 %v637, %v691
  %v698 = vmul.f32 %v694, 0.5
  %v699 = vmul.f32 %v695, 0.5
  %v700 = vmul.f32 %v696, 0.5
  %v701 = vtanh.pop %v698
  %v702 = vtanh.pop %v699
  %v703 = vtanh.pop %v700
  %v704 = vmul.f32 %v701, 0.5
  %v705 = vmul.f32 %v702, 0.5
  %v706 = vmul.f32 %v703, 0.5
  %v707 = vadd.f32 %v704, 0.5
  %v708 = vadd.f32 %v705, 0.5
  %v709 = vadd.f32 %v706, 0.5
  %v710 = vtanh.pop %v697
  %v711 = vmul.f32 %v708, %v628
  %v712 = vmul.f32 %v707, %v710
  %v713 = vadd.f32 %v711, %v712
  %v714 = vtanh.pop %v713
  %v715 = vmul.f32 %v709, %v714
  %s716 = smul.u32 4, 4
  %s717 = smul.addr %s716, 8
  %s718 = scalar_lea.vmem [#allocation2], %s717
  %v719 = vld [vmem:[%s718] sm:$0xff]
  %v720 = vld [vmem:[%s718 + $0x8] sm:$0xff]
  %v721 = vld [vmem:[%s718 + $0x10] sm:$0xff]
  %v722 = vld [vmem:[%s718 + $0x18] sm:$0xff]
  %v723 = vpack.c.bf16 %v715, %v715
  %v725 = vsel %vm383, %v723, 0
  %727 = vmatpush.bf16.msra.mxu0 0
  %728 = vmatpush.bf16.msra.mxu0 0
  %729 = vmatpush.bf16.msra.mxu0 0
  %730 = vmatpush.bf16.msra.mxu0 0
  %731 = vmatpush.bf16.msra.mxu0 %v363
  %732 = vmatpush.bf16.msra.mxu0 %v359
  %733 = vmatpush.bf16.msra.mxu0 %v355
  %734 = vmatpush.bf16.msra.mxu0 %v351
  %735 = vmatmul.bf16.gmra.mxu0 %v725
  %v736 = vpop.f32.mrf.mxu0
  %v737 = vadd.f32 0.0, %v736
  %v738 = vpop.f32.mrf.mxu0
  %739 = vdwg.mxu0
  %740 = vmatpush.bf16.msra.mxu0 0
  %741 = vmatpush.bf16.msra.mxu0 0
  %742 = vmatpush.bf16.msra.mxu0 0
  %743 = vmatpush.bf16.msra.mxu0 0
  %744 = vmatpush.bf16.msra.mxu0 %v364
  %745 = vmatpush.bf16.msra.mxu0 %v360
  %746 = vmatpush.bf16.msra.mxu0 %v356
  %747 = vmatpush.bf16.msra.mxu0 %v352
  %748 = vmatmul.bf16.gmra.mxu0 %v725
  %v749 = vpop.f32.mrf.mxu0
  %v750 = vadd.f32 0.0, %v749
  %v751 = vpop.f32.mrf.mxu0
  %752 = vdwg.mxu0
  %753 = vmatpush.bf16.msra.mxu0 0
  %754 = vmatpush.bf16.msra.mxu0 0
  %755 = vmatpush.bf16.msra.mxu0 0
  %756 = vmatpush.bf16.msra.mxu0 0
  %757 = vmatpush.bf16.msra.mxu0 %v365
  %758 = vmatpush.bf16.msra.mxu0 %v361
  %759 = vmatpush.bf16.msra.mxu0 %v357
  %760 = vmatpush.bf16.msra.mxu0 %v353
  %761 = vmatmul.bf16.gmra.mxu0 %v725
  %v762 = vpop.f32.mrf.mxu0
  %v763 = vadd.f32 0.0, %v762
  %v764 = vpop.f32.mrf.mxu0
  %765 = vdwg.mxu0
  %766 = vmatpush.bf16.msra.mxu0 0
  %767 = vmatpush.bf16.msra.mxu0 0
  %768 = vmatpush.bf16.msra.mxu0 0
  %769 = vmatpush.bf16.msra.mxu0 0
  %770 = vmatpush.bf16.msra.mxu0 %v366
  %771 = vmatpush.bf16.msra.mxu0 %v362
  %772 = vmatpush.bf16.msra.mxu0 %v358
  %773 = vmatpush.bf16.msra.mxu0 %v354
  %774 = vmatmul.bf16.gmra.mxu0 %v725
  %v775 = vpop.f32.mrf.mxu0
  %v776 = vadd.f32 0.0, %v775
  %v777 = vpop.f32.mrf.mxu0
  %778 = vdwg.mxu0
  %v779 = vadd.f32 %v719, %v737
  %v780 = vadd.f32 %v720, %v750
  %v781 = vadd.f32 %v721, %v763
  %v782 = vadd.f32 %v722, %v776
  %v783 = vmul.f32 %v779, 0.5
  %v784 = vmul.f32 %v780, 0.5
  %v785 = vmul.f32 %v781, 0.5
  %v786 = vtanh.pop %v783
  %v787 = vtanh.pop %v784
  %v788 = vtanh.pop %v785
  %v789 = vmul.f32 %v786, 0.5
  %v790 = vmul.f32 %v787, 0.5
  %v791 = vmul.f32 %v788, 0.5
  %v792 = vadd.f32 %v789, 0.5
  %v793 = vadd.f32 %v790, 0.5
  %v794 = vadd.f32 %v791, 0.5
  %v795 = vtanh.pop %v782
  %v796 = vmul.f32 %v793, %v713
  %v797 = vmul.f32 %v792, %v795
  %v798 = vadd.f32 %v796, %v797
  %v799 = vtanh.pop %v798
  %v800 = vmul.f32 %v794, %v799
  %s801 = smul.u32 5, 4
  %s802 = smul.addr %s801, 8
  %s803 = scalar_lea.vmem [#allocation2], %s802
  %v804 = vld [vmem:[%s803] sm:$0xff]
  %v805 = vld [vmem:[%s803 + $0x8] sm:$0xff]
  %v806 = vld [vmem:[%s803 + $0x10] sm:$0xff]
  %v807 = vld [vmem:[%s803 + $0x18] sm:$0xff]
  %v808 = vpack.c.bf16 %v800, %v800
  %v810 = vsel %vm383, %v808, 0
  %812 = vmatpush.bf16.msra.mxu0 0
  %813 = vmatpush.bf16.msra.mxu0 0
  %814 = vmatpush.bf16.msra.mxu0 0
  %815 = vmatpush.bf16.msra.mxu0 0
  %816 = vmatpush.bf16.msra.mxu0 %v363
  %817 = vmatpush.bf16.msra.mxu0 %v359
  %818 = vmatpush.bf16.msra.mxu0 %v355
  %819 = vmatpush.bf16.msra.mxu0 %v351
  %820 = vmatmul.bf16.gmra.mxu0 %v810
  %v821 = vpop.f32.mrf.mxu0
  %v822 = vadd.f32 0.0, %v821
  %v823 = vpop.f32.mrf.mxu0
  %824 = vdwg.mxu0
  %825 = vmatpush.bf16.msra.mxu0 0
  %826 = vmatpush.bf16.msra.mxu0 0
  %827 = vmatpush.bf16.msra.mxu0 0
  %828 = vmatpush.bf16.msra.mxu0 0
  %829 = vmatpush.bf16.msra.mxu0 %v364
  %830 = vmatpush.bf16.msra.mxu0 %v360
  %831 = vmatpush.bf16.msra.mxu0 %v356
  %832 = vmatpush.bf16.msra.mxu0 %v352
  %833 = vmatmul.bf16.gmra.mxu0 %v810
  %v834 = vpop.f32.mrf.mxu0
  %v835 = vadd.f32 0.0, %v834
  %v836 = vpop.f32.mrf.mxu0
  %837 = vdwg.mxu0
  %838 = vmatpush.bf16.msra.mxu0 0
  %839 = vmatpush.bf16.msra.mxu0 0
  %840 = vmatpush.bf16.msra.mxu0 0
  %841 = vmatpush.bf16.msra.mxu0 0
  %842 = vmatpush.bf16.msra.mxu0 %v365
  %843 = vmatpush.bf16.msra.mxu0 %v361
  %844 = vmatpush.bf16.msra.mxu0 %v357
  %845 = vmatpush.bf16.msra.mxu0 %v353
  %846 = vmatmul.bf16.gmra.mxu0 %v810
  %v847 = vpop.f32.mrf.mxu0
  %v848 = vadd.f32 0.0, %v847
  %v849 = vpop.f32.mrf.mxu0
  %850 = vdwg.mxu0
  %851 = vmatpush.bf16.msra.mxu0 0
  %852 = vmatpush.bf16.msra.mxu0 0
  %853 = vmatpush.bf16.msra.mxu0 0
  %854 = vmatpush.bf16.msra.mxu0 0
  %855 = vmatpush.bf16.msra.mxu0 %v366
  %856 = vmatpush.bf16.msra.mxu0 %v362
  %857 = vmatpush.bf16.msra.mxu0 %v358
  %858 = vmatpush.bf16.msra.mxu0 %v354
  %859 = vmatmul.bf16.gmra.mxu0 %v810
  %v860 = vpop.f32.mrf.mxu0
  %v861 = vadd.f32 0.0, %v860
  %v862 = vpop.f32.mrf.mxu0
  %863 = vdwg.mxu0
  %v864 = vadd.f32 %v804, %v822
  %v865 = vadd.f32 %v805, %v835
  %v866 = vadd.f32 %v806, %v848
  %v867 = vadd.f32 %v807, %v861
  %v868 = vmul.f32 %v864, 0.5
  %v869 = vmul.f32 %v865, 0.5
  %v870 = vmul.f32 %v866, 0.5
  %v871 = vtanh.pop %v868
  %v872 = vtanh.pop %v869
  %v873 = vtanh.pop %v870
  %v874 = vmul.f32 %v871, 0.5
  %v875 = vmul.f32 %v872, 0.5
  %v876 = vmul.f32 %v873, 0.5
  %v877 = vadd.f32 %v874, 0.5
  %v878 = vadd.f32 %v875, 0.5
  %v879 = vadd.f32 %v876, 0.5
  %v880 = vtanh.pop %v867
  %v881 = vmul.f32 %v878, %v798
  %v882 = vmul.f32 %v877, %v880
  %v883 = vadd.f32 %v881, %v882
  %v884 = vtanh.pop %v883
  %v885 = vmul.f32 %v879, %v884
  %s886 = smul.u32 6, 4
  %s887 = smul.addr %s886, 8
  %s888 = scalar_lea.vmem [#allocation2], %s887
  %v889 = vld [vmem:[%s888] sm:$0xff]
  %v890 = vld [vmem:[%s888 + $0x8] sm:$0xff]
  %v891 = vld [vmem:[%s888 + $0x10] sm:$0xff]
  %v892 = vld [vmem:[%s888 + $0x18] sm:$0xff]
  %v893 = vpack.c.bf16 %v885, %v885
  %v895 = vsel %vm383, %v893, 0
  %897 = vmatpush.bf16.msra.mxu0 0
  %898 = vmatpush.bf16.msra.mxu0 0
  %899 = vmatpush.bf16.msra.mxu0 0
  %900 = vmatpush.bf16.msra.mxu0 0
  %901 = vmatpush.bf16.msra.mxu0 %v363
  %902 = vmatpush.bf16.msra.mxu0 %v359
  %903 = vmatpush.bf16.msra.mxu0 %v355
  %904 = vmatpush.bf16.msra.mxu0 %v351
  %905 = vmatmul.bf16.gmra.mxu0 %v895
  %v906 = vpop.f32.mrf.mxu0
  %v907 = vadd.f32 0.0, %v906
  %v908 = vpop.f32.mrf.mxu0
  %909 = vdwg.mxu0
  %910 = vmatpush.bf16.msra.mxu0 0
  %911 = vmatpush.bf16.msra.mxu0 0
  %912 = vmatpush.bf16.msra.mxu0 0
  %913 = vmatpush.bf16.msra.mxu0 0
  %914 = vmatpush.bf16.msra.mxu0 %v364
  %915 = vmatpush.bf16.msra.mxu0 %v360
  %916 = vmatpush.bf16.msra.mxu0 %v356
  %917 = vmatpush.bf16.msra.mxu0 %v352
  %918 = vmatmul.bf16.gmra.mxu0 %v895
  %v919 = vpop.f32.mrf.mxu0
  %v920 = vadd.f32 0.0, %v919
  %v921 = vpop.f32.mrf.mxu0
  %922 = vdwg.mxu0
  %923 = vmatpush.bf16.msra.mxu0 0
  %924 = vmatpush.bf16.msra.mxu0 0
  %925 = vmatpush.bf16.msra.mxu0 0
  %926 = vmatpush.bf16.msra.mxu0 0
  %927 = vmatpush.bf16.msra.mxu0 %v365
  %928 = vmatpush.bf16.msra.mxu0 %v361
  %929 = vmatpush.bf16.msra.mxu0 %v357
  %930 = vmatpush.bf16.msra.mxu0 %v353
  %931 = vmatmul.bf16.gmra.mxu0 %v895
  %v932 = vpop.f32.mrf.mxu0
  %v933 = vadd.f32 0.0, %v932
  %v934 = vpop.f32.mrf.mxu0
  %935 = vdwg.mxu0
  %936 = vmatpush.bf16.msra.mxu0 0
  %937 = vmatpush.bf16.msra.mxu0 0
  %938 = vmatpush.bf16.msra.mxu0 0
  %939 = vmatpush.bf16.msra.mxu0 0
  %940 = vmatpush.bf16.msra.mxu0 %v366
  %941 = vmatpush.bf16.msra.mxu0 %v362
  %942 = vmatpush.bf16.msra.mxu0 %v358
  %943 = vmatpush.bf16.msra.mxu0 %v354
  %944 = vmatmul.bf16.gmra.mxu0 %v895
  %v945 = vpop.f32.mrf.mxu0
  %v946 = vadd.f32 0.0, %v945
  %v947 = vpop.f32.mrf.mxu0
  %948 = vdwg.mxu0
  %v949 = vadd.f32 %v889, %v907
  %v950 = vadd.f32 %v890, %v920
  %v951 = vadd.f32 %v891, %v933
  %v952 = vadd.f32 %v892, %v946
  %v953 = vmul.f32 %v949, 0.5
  %v954 = vmul.f32 %v950, 0.5
  %v955 = vmul.f32 %v951, 0.5
  %v956 = vtanh.pop %v953
  %v957 = vtanh.pop %v954
  %v958 = vtanh.pop %v955
  %v959 = vmul.f32 %v956, 0.5
  %v960 = vmul.f32 %v957, 0.5
  %v961 = vmul.f32 %v958, 0.5
  %v962 = vadd.f32 %v959, 0.5
  %v963 = vadd.f32 %v960, 0.5
  %v964 = vadd.f32 %v961, 0.5
  %v965 = vtanh.pop %v952
  %v966 = vmul.f32 %v963, %v883
  %v967 = vmul.f32 %v962, %v965
  %v968 = vadd.f32 %v966, %v967
  %v969 = vtanh.pop %v968
  %v970 = vmul.f32 %v964, %v969
  %s971 = smul.u32 7, 4
  %s972 = smul.addr %s971, 8
  %s973 = scalar_lea.vmem [#allocation2], %s972
  %v974 = vld [vmem:[%s973] sm:$0xff]
  %v975 = vld [vmem:[%s973 + $0x8] sm:$0xff]
  %v976 = vld [vmem:[%s973 + $0x10] sm:$0xff]
  %v977 = vld [vmem:[%s973 + $0x18] sm:$0xff]
  %v978 = vpack.c.bf16 %v970, %v970
  %v980 = vsel %vm383, %v978, 0
  %982 = vmatpush.bf16.msra.mxu0 0
  %983 = vmatpush.bf16.msra.mxu0 0
  %984 = vmatpush.bf16.msra.mxu0 0
  %985 = vmatpush.bf16.msra.mxu0 0
  %986 = vmatpush.bf16.msra.mxu0 %v363
  %987 = vmatpush.bf16.msra.mxu0 %v359
  %988 = vmatpush.bf16.msra.mxu0 %v355
  %989 = vmatpush.bf16.msra.mxu0 %v351
  %990 = vmatmul.bf16.gmra.mxu0 %v980
  %v991 = vpop.f32.mrf.mxu0
  %v992 = vadd.f32 0.0, %v991
  %v993 = vpop.f32.mrf.mxu0
  %994 = vdwg.mxu0
  %995 = vmatpush.bf16.msra.mxu0 0
  %996 = vmatpush.bf16.msra.mxu0 0
  %997 = vmatpush.bf16.msra.mxu0 0
  %998 = vmatpush.bf16.msra.mxu0 0
  %999 = vmatpush.bf16.msra.mxu0 %v364
  %1000 = vmatpush.bf16.msra.mxu0 %v360
  %1001 = vmatpush.bf16.msra.mxu0 %v356
  %1002 = vmatpush.bf16.msra.mxu0 %v352
  %1003 = vmatmul.bf16.gmra.mxu0 %v980
  %v1004 = vpop.f32.mrf.mxu0
  %v1005 = vadd.f32 0.0, %v1004
  %v1006 = vpop.f32.mrf.mxu0
  %1007 = vdwg.mxu0
  %1008 = vmatpush.bf16.msra.mxu0 0
  %1009 = vmatpush.bf16.msra.mxu0 0
  %1010 = vmatpush.bf16.msra.mxu0 0
  %1011 = vmatpush.bf16.msra.mxu0 0
  %1012 = vmatpush.bf16.msra.mxu0 %v365
  %1013 = vmatpush.bf16.msra.mxu0 %v361
  %1014 = vmatpush.bf16.msra.mxu0 %v357
  %1015 = vmatpush.bf16.msra.mxu0 %v353
  %1016 = vmatmul.bf16.gmra.mxu0 %v980
  %v1017 = vpop.f32.mrf.mxu0
  %v1018 = vadd.f32 0.0, %v1017
  %v1019 = vpop.f32.mrf.mxu0
  %1020 = vdwg.mxu0
  %1021 = vmatpush.bf16.msra.mxu0 0
  %1022 = vmatpush.bf16.msra.mxu0 0
  %1023 = vmatpush.bf16.msra.mxu0 0
  %1024 = vmatpush.bf16.msra.mxu0 0
  %1025 = vmatpush.bf16.msra.mxu0 %v366
  %1026 = vmatpush.bf16.msra.mxu0 %v362
  %1027 = vmatpush.bf16.msra.mxu0 %v358
  %1028 = vmatpush.bf16.msra.mxu0 %v354
  %1029 = vmatmul.bf16.gmra.mxu0 %v980
  %v1030 = vpop.f32.mrf.mxu0
  %v1031 = vadd.f32 0.0, %v1030
  %v1032 = vpop.f32.mrf.mxu0
  %1033 = vdwg.mxu0
  %v1034 = vadd.f32 %v974, %v992
  %v1035 = vadd.f32 %v975, %v1005
  %v1036 = vadd.f32 %v976, %v1018
  %v1037 = vadd.f32 %v977, %v1031
  %v1038 = vmul.f32 %v1034, 0.5
  %v1039 = vmul.f32 %v1035, 0.5
  %v1040 = vmul.f32 %v1036, 0.5
  %v1041 = vtanh.pop %v1038
  %v1042 = vtanh.pop %v1039
  %v1043 = vtanh.pop %v1040
  %v1044 = vmul.f32 %v1041, 0.5
  %v1045 = vmul.f32 %v1042, 0.5
  %v1046 = vmul.f32 %v1043, 0.5
  %v1047 = vadd.f32 %v1044, 0.5
  %v1048 = vadd.f32 %v1045, 0.5
  %v1049 = vadd.f32 %v1046, 0.5
  %v1050 = vtanh.pop %v1037
  %v1051 = vmul.f32 %v1048, %v968
  %v1052 = vmul.f32 %v1047, %v1050
  %v1053 = vadd.f32 %v1051, %v1052
  %v1054 = vtanh.pop %v1053
  %v1055 = vmul.f32 %v1049, %v1054
  %v1056 = vpack.c.bf16 %v1055, %v1055
  %v1057 = vld [vmem:[%s4] sm:$0xf]
  %v1058 = vld [vmem:[%s4 + $0x4] sm:$0xf]
  %v1059 = vld [vmem:[%s4 + $0x8] sm:$0xf]
  %v1060 = vld [vmem:[%s4 + $0xc] sm:$0xf]
  %v1061 = vld [vmem:[%s4 + $0x10] sm:$0xf]
  %v1062 = vld [vmem:[%s4 + $0x14] sm:$0xf]
  %v1063 = vld [vmem:[%s4 + $0x18] sm:$0xf]
  %v1064 = vld [vmem:[%s4 + $0x1c] sm:$0xf]
  %v1065 = vld [vmem:[%s5] sm:$0x1]
  %v1067 = vperm.slane %v1065, 0
  %v1077 = vunpack.c.l.b16 %v1057
  %v1078 = vunpack.c.l.b16 %v1058
  %v1079 = vunpack.c.l.b16 %v1059
  %v1080 = vunpack.c.l.b16 %v1060
  %v1081 = vunpack.c.l.b16 %v1061
  %v1082 = vunpack.c.l.b16 %v1062
  %v1083 = vunpack.c.l.b16 %v1063
  %v1084 = vunpack.c.l.b16 %v1064
  %v1085 = vpack.c.b16 %v1078, %v1077
  %v1086 = vpack.c.b16 %v1080, %v1079
  %v1087 = vpack.c.b16 %v1082, %v1081
  %v1088 = vpack.c.b16 %v1084, %v1083
  %v1094 = vsel %vm383, %v1056, 0
  %1096 = vmatpush.bf16.msra.mxu0 0
  %1097 = vmatpush.bf16.msra.mxu0 0
  %1098 = vmatpush.bf16.msra.mxu0 0
  %1099 = vmatpush.bf16.msra.mxu0 0
  %1100 = vmatpush.bf16.msra.mxu0 %v1088
  %1101 = vmatpush.bf16.msra.mxu0 %v1087
  %1102 = vmatpush.bf16.msra.mxu0 %v1086
  %1103 = vmatpush.bf16.msra.mxu0 %v1085
  %1104 = vmatmul.bf16.gmra.mxu0 %v1094
  %v1105 = vpop.f32.mrf.mxu0
  %v1106 = vadd.f32 %v1067, %v1105
  %v1107 = vpop.f32.mrf.mxu0
  %1108 = vdwg.mxu0
  %1109 = vst [vmem:[%s6] sm:$0xff] %v1106
  // Predicated region
  $region26: #{rnn_forward.1} parent=0 // pred_check
    _
  $region27: #{rnn_forward.1} parent=0 // pred_check_branch
    %1111 = sbr.rel (0) target = $region29
  $region28: #{rnn_forward.1} parent=0 // pred_region
    _
  $region29: #{rnn_forward.1} parent=0 // pred_fallthru
    _
  // Predicated region
  $region30: #{rnn_forward.1} parent=0 // pred_check
    _
  $region31: #{rnn_forward.1} parent=0 // pred_check_branch
    %1113 = sbr.rel (0) target = $region33
  $region32: #{rnn_forward.1} parent=0 // pred_region
    _
  $region33: #{rnn_forward.1} parent=0 // pred_fallthru
    _

</llo_original>
